<compile_context>
chip_gen: v6e
topology: v6e:2x2x1
jax: 0.10.0
libtpu: 0.0.40
codegen_flags: <defaults>
</compile_context>

<pallas_src>
import jax
import jax.numpy as jnp
from jax import lax
from jax.experimental import pallas as pl
from jax.experimental.pallas import tpu as pltpu


def _make_group_kernel(N, G, M, TG):
    N8 = N // 8

    def kernel(xyz_p_ref, xyz_r_ref, center_ref, nb_ref, ctr_scratch):
        """One (batch, group-tile) grid step.

        xyz_p_ref:   (3, 8, N//8) f32  sublane-packed coordinate rows (FPS)
        xyz_r_ref:   (3, N)       f32  lane-dense coordinate rows (KNN)
        center_ref:  (TG, 3)      f32  output: centers of this group tile
        nb_ref:      (TG, 3*M)    f32  output: lanes [3m, 3m+3) = m-th neighbor
                                        offset of each group in the tile
        ctr_scratch: (G, 3)       f32  persistent scratch: all G FPS centers
        """
        gt = pl.program_id(1)

        # ----------------- FPS: once per batch element (first tile) --------
        @pl.when(gt == 0)
        def _fps():
            xp = xyz_p_ref[...]                                    # (3, 8, N8)
            x0, x1, x2 = xp[0], xp[1], xp[2]                       # (8, N8) each
            idx_p = (lax.broadcasted_iota(jnp.int32, (8, N8), 0) * N8
                     + lax.broadcasted_iota(jnp.int32, (8, N8), 1))

            def fps_body(g, carry):
                min_d, cur = carry                                 # (8,N8), i32
                pick = idx_p == cur                                # (8, N8)
                d = None
                for k, xk in enumerate((x0, x1, x2)):
                    # exact coordinate of the current point (masked lane sum)
                    ck = jnp.sum(jnp.where(pick, xk, 0.0),
                                 keepdims=True)                    # (1, 1)
                    ctr_scratch[pl.ds(g, 1), k:k + 1] = ck
                    diff = xk - ck                                 # VPU, no MXU
                    d = diff * diff if d is None else d + diff * diff
                min_d = jnp.minimum(min_d, d)
                mx = jnp.max(min_d)
                nxt = jnp.min(
                    jnp.where(min_d == mx, idx_p, N)).astype(jnp.int32)
                return min_d, nxt

            lax.fori_loop(
                0, G, fps_body,
                (jnp.full((8, N8), jnp.inf, dtype=jnp.float32), jnp.int32(0)))

        # ----------------- KNN for this tile of TG groups -------------------
        g0 = pl.multiple_of(gt * TG, TG)
        ctr = ctr_scratch[pl.ds(g0, TG), :]                        # (TG, 3)
        center_ref[...] = ctr

        xr = xyz_r_ref[...]                                        # (3, N)
        rows = [xr[k:k + 1, :] for k in range(3)]                  # 3 x (1, N)
        cols = [ctr[:, k:k + 1] for k in range(3)]                 # 3 x (TG, 1)

        # direct squared distances, VPU only, no cancellation
        dist = None                                                # (TG, N)
        for k in range(3):
            diff = cols[k] - rows[k]
            dist = diff * diff if dist is None else dist + diff * diff

        iota_n = lax.broadcasted_iota(jnp.int32, (1, N), 1)        # (1, N)
        # M is a small static trip count; unrolled so output lane offsets are
        # static.
        for m in range(M):
            mn = jnp.min(dist, axis=1, keepdims=True)              # (TG, 1)
            idx = jnp.min(jnp.where(dist == mn, iota_n, N),
                          axis=1, keepdims=True)                   # (TG, 1)
            onehot = iota_n == idx                                 # (TG, N)
            for k in range(3):
                # gather on VPU+XLU: masked select + lane-reduce sum
                sel_k = jnp.sum(jnp.where(onehot, rows[k], 0.0),
                                axis=1, keepdims=True)             # (TG, 1)
                nb_ref[:, 3 * m + k:3 * m + k + 1] = sel_k - cols[k]
            dist = jnp.where(onehot, jnp.inf, dist)                # mask picked

    return kernel


def group_forward(xyz, num_group, group_size, *, tile_g=None):
    """JAX wrapper reproducing Group.forward: returns (neighborhood, center)."""
    B, N, C = xyz.shape
    assert C == 3
    G, M = int(num_group), int(group_size)
    if N % 8 != 0:
        raise ValueError("N must be a multiple of 8")  # TODO(synk): pad + mask

    if tile_g is None:
        if G <= 128:
            tile_g = G
        else:
            cands = [d for d in range(128, 7, -8) if G % d == 0]
            tile_g = cands[0] if cands else G
    assert G % tile_g == 0

    xyz = xyz.astype(jnp.float32)
    xyz_t = jnp.transpose(xyz, (0, 2, 1))                 # (B, 3, N)
    xyz_p = xyz_t.reshape(B, 3, 8, N // 8)                # free view of xyz_t

    kernel = _make_group_kernel(N, G, M, tile_g)

    flops = int(B * (17 * G * N + 6 * M * G * N))
    bytes_accessed = int(B * 4 * (2 * 3 * N + G * 3 + G * 3 * M))
    vmem_limit = int(min(64 * 1024 * 1024,
                         max(16 * 1024 * 1024, 8 * tile_g * N * 4)))

    center, nb_flat = pl.pallas_call(
        kernel,
        out_shape=(jax.ShapeDtypeStruct((B, G, 3), jnp.float32),
                   jax.ShapeDtypeStruct((B, G, 3 * M), jnp.float32)),
        grid=(B, G // tile_g),
        in_specs=[
            pl.BlockSpec((None, 3, 8, N // 8), lambda b, t: (b, 0, 0, 0)),
            pl.BlockSpec((None, 3, N), lambda b, t: (b, 0, 0)),
        ],
        out_specs=[
            pl.BlockSpec((None, tile_g, 3), lambda b, t: (b, t, 0)),
            pl.BlockSpec((None, tile_g, 3 * M), lambda b, t: (b, t, 0)),
        ],
        scratch_shapes=[pltpu.VMEM((G, 3), jnp.float32)],
        compiler_params=pltpu.CompilerParams(
            dimension_semantics=("parallel", "arbitrary"),
            vmem_limit_bytes=vmem_limit),
        cost_estimate=pl.CostEstimate(flops=flops, transcendentals=0,
                                      bytes_accessed=bytes_accessed),
    )(xyz_p, xyz_t)

    neighborhood = nb_flat.reshape(B, G, M, 3)
    return neighborhood, center


def _group_reference(xyz, num_group, group_size):
    """Pure-JAX reference with the same semantics as the PyTorch module."""
    G, M = num_group, group_size

    def one(pts):                                         # (N, 3)
        n = pts.shape[0]

        def fps_body(i, state):
            centers, min_d, cur = state
            c = pts[cur]
            centers = centers.at[i].set(c)
            d = jnp.sum((pts - c[None, :]) ** 2, axis=-1)
            min_d = jnp.minimum(min_d, d)
            return centers, min_d, jnp.argmax(min_d).astype(jnp.int32)

        centers, _, _ = lax.fori_loop(
            0, G, fps_body,
            (jnp.zeros((G, 3), jnp.float32),
             jnp.full((n,), jnp.inf, dtype=jnp.float32),
             jnp.int32(0)))
        d = jnp.sum((centers[:, None, :] - pts[None, :, :]) ** 2, axis=-1)
        idx = jnp.argsort(d, axis=-1)[:, :M]              # ascending distance
        nb = pts[idx] - centers[:, None, :]               # (G, M, 3)
        return nb, centers

    return jax.vmap(one)(xyz.astype(jnp.float32))


if __name__ == "__main__":
    B, N = 2, 64          # batch, number of points
    NUM_GROUP = 8         # G
    GROUP_SIZE = 8        # M

    key = jax.random.PRNGKey(0)
    xyz = jax.random.normal(key, (B, N, 3), dtype=jnp.float32)

    neighborhood, center = group_forward(xyz, NUM_GROUP, GROUP_SIZE)
    neighborhood, center = jax.block_until_ready((neighborhood, center))

    # sanity checks
    assert neighborhood.shape == (B, NUM_GROUP, GROUP_SIZE, 3)
    assert center.shape == (B, NUM_GROUP, 3)
    assert bool(jnp.all(jnp.isfinite(neighborhood)))
    assert bool(jnp.all(jnp.isfinite(center)))
    # a group's nearest neighbor is its own center -> first neighbor offset == 0
    assert bool(jnp.all(jnp.abs(neighborhood[:, :, 0, :]) < 1e-5))

    # pure-JAX reference check
    nb_ref, ctr_ref = _group_reference(xyz, NUM_GROUP, GROUP_SIZE)
    assert bool(jnp.allclose(center, ctr_ref, atol=1e-5))
    assert bool(jnp.allclose(neighborhood, nb_ref, atol=1e-5))

    print("KERNEL_OK")
</pallas_src>

<mosaic_0001>
module attributes {stable_mosaic.version = 11 : i64} {
  func.func @kernel(%arg0: i32, %arg1: i32, %arg2: memref<1x3x8x8xf32, #tpu.memory_space<vmem>>, %arg3: memref<1x3x64xf32, #tpu.memory_space<vmem>>, %arg4: memref<1x8x3xf32, #tpu.memory_space<vmem>>, %arg5: memref<1x8x24xf32, #tpu.memory_space<vmem>>, %arg6: memref<8x3xf32, #tpu.memory_space<vmem>>) attributes {dimension_semantics = [#tpu.dimension_semantics<parallel>, #tpu.dimension_semantics<arbitrary>], iteration_bounds = array<i64: 2, 1>, scalar_prefetch = 0 : i64, scratch_operands = 1 : i64, tpu.core_type = #tpu.core_type<tc>, window_params = [{transform_indices = @transform_0, window_bounds = array<i64: 1, 3, 8, 8>}, {transform_indices = @transform_1, window_bounds = array<i64: 1, 3, 64>}, {transform_indices = @transform_2, window_bounds = array<i64: 1, 8, 3>}, {transform_indices = @transform_3, window_bounds = array<i64: 1, 8, 24>}]} {
    %c0_i32 = arith.constant 0 : i32
    %0 = arith.cmpi eq, %arg1, %c0_i32 : i32
    %1 = arith.extui %0 : i1 to i32
    %c0_i32_0 = arith.constant 0 : i32
    %2 = arith.cmpi ne, %1, %c0_i32_0 : i32
    scf.if %2 {
      %c0_133 = arith.constant 0 : index
      %c0_134 = arith.constant 0 : index
      %c0_135 = arith.constant 0 : index
      %c0_136 = arith.constant 0 : index
      %391 = vector.load %arg2[%c0_133, %c0_134, %c0_135, %c0_136] : memref<1x3x8x8xf32, #tpu.memory_space<vmem>>, vector<1x3x8x8xf32>
      %392 = vector.shape_cast %391 : vector<1x3x8x8xf32> to vector<3x8x8xf32>
      %393 = vector.extract_strided_slice %392 {offsets = [0, 0, 0], sizes = [1, 8, 8], strides = [1, 1, 1]} : vector<3x8x8xf32> to vector<1x8x8xf32>
      %394 = vector.shape_cast %393 : vector<1x8x8xf32> to vector<8x8xf32>
      %395 = vector.extract_strided_slice %392 {offsets = [1, 0, 0], sizes = [1, 8, 8], strides = [1, 1, 1]} : vector<3x8x8xf32> to vector<1x8x8xf32>
      %396 = vector.shape_cast %395 : vector<1x8x8xf32> to vector<8x8xf32>
      %397 = vector.extract_strided_slice %392 {offsets = [2, 0, 0], sizes = [1, 8, 8], strides = [1, 1, 1]} : vector<3x8x8xf32> to vector<1x8x8xf32>
      %398 = vector.shape_cast %397 : vector<1x8x8xf32> to vector<8x8xf32>
      %399 = tpu.iota {dimensions = array<i32: 0>} : vector<8x8xi32>
      %c8_i32_137 = arith.constant 8 : i32
      %400 = vector.broadcast %c8_i32_137 : i32 to vector<8x8xi32>
      %401 = arith.muli %399, %400 : vector<8x8xi32>
      %402 = tpu.iota {dimensions = array<i32: 1>} : vector<8x8xi32>
      %403 = arith.addi %401, %402 : vector<8x8xi32>
      %cst_138 = arith.constant 0x7F800000 : f32
      %404 = vector.broadcast %cst_138 : f32 to vector<8x8xf32>
      %c0_i32_139 = arith.constant 0 : i32
      %c0_i32_140 = arith.constant 0 : i32
      %c8_i32_141 = arith.constant 8 : i32
      %405 = arith.addi %c0_i32_140, %c8_i32_141 : i32
      %c1_i32 = arith.constant 1 : i32
      %406:2 = scf.for %arg7 = %c0_i32_140 to %405 step %c1_i32 iter_args(%arg8 = %404, %arg9 = %c0_i32_139) -> (vector<8x8xf32>, i32)  : i32 {
        %407 = vector.broadcast %arg9 : i32 to vector<8x8xi32>
        %408 = arith.cmpi eq, %403, %407 : vector<8x8xi32>
        %cst_143 = arith.constant 0.000000e+00 : f32
        %409 = vector.broadcast %cst_143 : f32 to vector<8x8xf32>
        %410 = arith.select %408, %394, %409 : vector<8x8xi1>, vector<8x8xf32>
        %411 = vector.shape_cast %410 : vector<8x8xf32> to vector<1x8x8xf32>
        %cst_144 = arith.constant dense<0.000000e+00> : vector<1xf32>
        %412 = vector.multi_reduction <add>, %411, %cst_144 [1, 2] : vector<1x8x8xf32> to vector<1xf32>
        %413 = vector.shape_cast %412 : vector<1xf32> to vector<1x1x1xf32>
        %414 = vector.extract %413[0, 0, 0] : f32 from vector<1x1x1xf32>
        %415 = vector.broadcast %414 : f32 to vector<1x1xf32>
        %416 = arith.index_cast %arg7 : i32 to index
        %c0_145 = arith.constant 0 : index
        %417 = vector.load %arg6[%416, %c0_145] : memref<8x3xf32, #tpu.memory_space<vmem>>, vector<1x1xf32>
        tpu.vector_store %arg6[%416, %c0_145], %415 {strides = array<i32>} : memref<8x3xf32, #tpu.memory_space<vmem>>, vector<1x1xf32>,
        %418 = vector.broadcast %415 : vector<1x1xf32> to vector<8x8xf32>
        %419 = arith.subf %394, %418 : vector<8x8xf32>
        %420 = arith.mulf %419, %419 : vector<8x8xf32>
        %cst_146 = arith.constant 0.000000e+00 : f32
        %421 = vector.broadcast %cst_146 : f32 to vector<8x8xf32>
        %422 = arith.select %408, %396, %421 : vector<8x8xi1>, vector<8x8xf32>
        %423 = vector.shape_cast %422 : vector<8x8xf32> to vector<1x8x8xf32>
        %cst_147 = arith.constant dense<0.000000e+00> : vector<1xf32>
        %424 = vector.multi_reduction <add>, %423, %cst_147 [1, 2] : vector<1x8x8xf32> to vector<1xf32>
        %425 = vector.shape_cast %424 : vector<1xf32> to vector<1x1x1xf32>
        %426 = vector.extract %425[0, 0, 0] : f32 from vector<1x1x1xf32>
        %427 = vector.broadcast %426 : f32 to vector<1x1xf32>
        %428 = arith.index_cast %arg7 : i32 to index
        %c1_148 = arith.constant 1 : index
        %429 = vector.load %arg6[%428, %c1_148] : memref<8x3xf32, #tpu.memory_space<vmem>>, vector<1x1xf32>
        tpu.vector_store %arg6[%428, %c1_148], %427 {strides = array<i32>} : memref<8x3xf32, #tpu.memory_space<vmem>>, vector<1x1xf32>,
        %430 = vector.broadcast %427 : vector<1x1xf32> to vector<8x8xf32>
        %431 = arith.subf %396, %430 : vector<8x8xf32>
        %432 = arith.mulf %431, %431 : vector<8x8xf32>
        %433 = arith.addf %420, %432 : vector<8x8xf32>
        %cst_149 = arith.constant 0.000000e+00 : f32
        %434 = vector.broadcast %cst_149 : f32 to vector<8x8xf32>
        %435 = arith.select %408, %398, %434 : vector<8x8xi1>, vector<8x8xf32>
        %436 = vector.shape_cast %435 : vector<8x8xf32> to vector<1x8x8xf32>
        %cst_150 = arith.constant dense<0.000000e+00> : vector<1xf32>
        %437 = vector.multi_reduction <add>, %436, %cst_150 [1, 2] : vector<1x8x8xf32> to vector<1xf32>
        %438 = vector.shape_cast %437 : vector<1xf32> to vector<1x1x1xf32>
        %439 = vector.extract %438[0, 0, 0] : f32 from vector<1x1x1xf32>
        %440 = vector.broadcast %439 : f32 to vector<1x1xf32>
        %441 = arith.index_cast %arg7 : i32 to index
        %c2_151 = arith.constant 2 : index
        %442 = vector.load %arg6[%441, %c2_151] : memref<8x3xf32, #tpu.memory_space<vmem>>, vector<1x1xf32>
        tpu.vector_store %arg6[%441, %c2_151], %440 {strides = array<i32>} : memref<8x3xf32, #tpu.memory_space<vmem>>, vector<1x1xf32>,
        %443 = vector.broadcast %440 : vector<1x1xf32> to vector<8x8xf32>
        %444 = arith.subf %398, %443 : vector<8x8xf32>
        %445 = arith.mulf %444, %444 : vector<8x8xf32>
        %446 = arith.addf %433, %445 : vector<8x8xf32>
        %447 = arith.minimumf %arg8, %446 : vector<8x8xf32>
        %448 = vector.shape_cast %447 : vector<8x8xf32> to vector<1x8x8xf32>
        %cst_152 = arith.constant dense<0xFF800000> : vector<1xf32>
        %449 = vector.multi_reduction <maximumf>, %448, %cst_152 [1, 2] : vector<1x8x8xf32> to vector<1xf32>
        %450 = vector.shape_cast %449 : vector<1xf32> to vector<1x1x1xf32>
        %451 = vector.extract %450[0, 0, 0] : f32 from vector<1x1x1xf32>
        %452 = vector.broadcast %451 : f32 to vector<8x8xf32>
        %453 = arith.cmpf oeq, %447, %452 : vector<8x8xf32>
        %c64_i32_153 = arith.constant 64 : i32
        %454 = vector.broadcast %c64_i32_153 : i32 to vector<8x8xi32>
        %455 = arith.select %453, %403, %454 : vector<8x8xi1>, vector<8x8xi32>
        %456 = vector.shape_cast %455 : vector<8x8xi32> to vector<1x8x8xi32>
        %cst_154 = arith.constant dense<2147483647> : vector<1xi32>
        %457 = vector.multi_reduction <minsi>, %456, %cst_154 [1, 2] : vector<1x8x8xi32> to vector<1xi32>
        %458 = vector.shape_cast %457 : vector<1xi32> to vector<1x1x1xi32>
        %459 = vector.extract %458[0, 0, 0] : i32 from vector<1x1x1xi32>
        scf.yield %447, %459 : vector<8x8xf32>, i32
      }
      %c8_i32_142 = arith.constant 8 : i32
    } else {
    }
    %c8_i32 = arith.constant 8 : i32
    %3 = arith.muli %arg1, %c8_i32 : i32
    %4 = tpu.assume_multiple %3, 8 : i32
    %5 = arith.index_cast %4 : i32 to index
    %c0 = arith.constant 0 : index
    %6 = vector.load %arg6[%5, %c0] : memref<8x3xf32, #tpu.memory_space<vmem>>, vector<8x3xf32>
    %c0_1 = arith.constant 0 : index
    %c0_2 = arith.constant 0 : index
    %c0_3 = arith.constant 0 : index
    %7 = vector.load %arg4[%c0_1, %c0_2, %c0_3] : memref<1x8x3xf32, #tpu.memory_space<vmem>>, vector<1x8x3xf32>
    %8 = vector.shape_cast %7 : vector<1x8x3xf32> to vector<8x3xf32>
    %9 = vector.shape_cast %6 : vector<8x3xf32> to vector<1x8x3xf32>
    tpu.vector_store %arg4[%c0_1, %c0_2, %c0_3], %9 {strides = array<i32>} : memref<1x8x3xf32, #tpu.memory_space<vmem>>, vector<1x8x3xf32>,
    %c0_4 = arith.constant 0 : index
    %c0_5 = arith.constant 0 : index
    %c0_6 = arith.constant 0 : index
    %10 = vector.load %arg3[%c0_4, %c0_5, %c0_6] : memref<1x3x64xf32, #tpu.memory_space<vmem>>, vector<1x3x64xf32>
    %11 = vector.shape_cast %10 : vector<1x3x64xf32> to vector<3x64xf32>
    %12 = vector.extract_strided_slice %11 {offsets = [0, 0], sizes = [1, 64], strides = [1, 1]} : vector<3x64xf32> to vector<1x64xf32>
    %13 = vector.extract_strided_slice %11 {offsets = [1, 0], sizes = [1, 64], strides = [1, 1]} : vector<3x64xf32> to vector<1x64xf32>
    %14 = vector.extract_strided_slice %11 {offsets = [2, 0], sizes = [1, 64], strides = [1, 1]} : vector<3x64xf32> to vector<1x64xf32>
    %15 = vector.extract_strided_slice %6 {offsets = [0, 0], sizes = [8, 1], strides = [1, 1]} : vector<8x3xf32> to vector<8x1xf32>
    %16 = vector.extract_strided_slice %6 {offsets = [0, 1], sizes = [8, 1], strides = [1, 1]} : vector<8x3xf32> to vector<8x1xf32>
    %17 = vector.extract_strided_slice %6 {offsets = [0, 2], sizes = [8, 1], strides = [1, 1]} : vector<8x3xf32> to vector<8x1xf32>
    %18 = vector.broadcast %15 : vector<8x1xf32> to vector<8x64xf32>
    %19 = vector.broadcast %12 : vector<1x64xf32> to vector<8x64xf32>
    %20 = arith.subf %18, %19 : vector<8x64xf32>
    %21 = arith.mulf %20, %20 : vector<8x64xf32>
    %22 = vector.broadcast %16 : vector<8x1xf32> to vector<8x64xf32>
    %23 = vector.broadcast %13 : vector<1x64xf32> to vector<8x64xf32>
    %24 = arith.subf %22, %23 : vector<8x64xf32>
    %25 = arith.mulf %24, %24 : vector<8x64xf32>
    %26 = arith.addf %21, %25 : vector<8x64xf32>
    %27 = vector.broadcast %17 : vector<8x1xf32> to vector<8x64xf32>
    %28 = vector.broadcast %14 : vector<1x64xf32> to vector<8x64xf32>
    %29 = arith.subf %27, %28 : vector<8x64xf32>
    %30 = arith.mulf %29, %29 : vector<8x64xf32>
    %31 = arith.addf %26, %30 : vector<8x64xf32>
    %32 = tpu.iota {dimensions = array<i32: 1>} : vector<1x64xi32>
    %cst = arith.constant dense<0x7F800000> : vector<8xf32>
    %33 = vector.multi_reduction <minimumf>, %31, %cst [1] : vector<8x64xf32> to vector<8xf32>
    %34 = vector.shape_cast %33 : vector<8xf32> to vector<8x1xf32>
    %35 = vector.broadcast %34 : vector<8x1xf32> to vector<8x64xf32>
    %36 = arith.cmpf oeq, %31, %35 : vector<8x64xf32>
    %c64_i32 = arith.constant 64 : i32
    %37 = vector.shape_cast %32 : vector<1x64xi32> to vector<1x64xi32>
    %38 = vector.broadcast %37 : vector<1x64xi32> to vector<8x64xi32>
    %39 = vector.broadcast %c64_i32 : i32 to vector<8x64xi32>
    %40 = arith.select %36, %38, %39 : vector<8x64xi1>, vector<8x64xi32>
    %cst_7 = arith.constant dense<2147483647> : vector<8xi32>
    %41 = vector.multi_reduction <minsi>, %40, %cst_7 [1] : vector<8x64xi32> to vector<8xi32>
    %42 = vector.shape_cast %41 : vector<8xi32> to vector<8x1xi32>
    %43 = vector.broadcast %32 : vector<1x64xi32> to vector<8x64xi32>
    %44 = vector.broadcast %42 : vector<8x1xi32> to vector<8x64xi32>
    %45 = arith.cmpi eq, %43, %44 : vector<8x64xi32>
    %cst_8 = arith.constant 0.000000e+00 : f32
    %46 = vector.shape_cast %12 : vector<1x64xf32> to vector<1x64xf32>
    %47 = vector.broadcast %46 : vector<1x64xf32> to vector<8x64xf32>
    %48 = vector.broadcast %cst_8 : f32 to vector<8x64xf32>
    %49 = arith.select %45, %47, %48 : vector<8x64xi1>, vector<8x64xf32>
    %cst_9 = arith.constant dense<0.000000e+00> : vector<8xf32>
    %50 = vector.multi_reduction <add>, %49, %cst_9 [1] : vector<8x64xf32> to vector<8xf32>
    %51 = vector.shape_cast %50 : vector<8xf32> to vector<8x1xf32>
    %52 = arith.subf %51, %15 : vector<8x1xf32>
    %c0_10 = arith.constant 0 : index
    %c0_11 = arith.constant 0 : index
    %c0_12 = arith.constant 0 : index
    %53 = vector.load %arg5[%c0_10, %c0_11, %c0_12] : memref<1x8x24xf32, #tpu.memory_space<vmem>>, vector<1x8x1xf32>
    %54 = vector.shape_cast %53 : vector<1x8x1xf32> to vector<8x1xf32>
    %55 = vector.shape_cast %52 : vector<8x1xf32> to vector<1x8x1xf32>
    tpu.vector_store %arg5[%c0_10, %c0_11, %c0_12], %55 {strides = array<i32>} : memref<1x8x24xf32, #tpu.memory_space<vmem>>, vector<1x8x1xf32>,
    %cst_13 = arith.constant 0.000000e+00 : f32
    %56 = vector.shape_cast %13 : vector<1x64xf32> to vector<1x64xf32>
    %57 = vector.broadcast %56 : vector<1x64xf32> to vector<8x64xf32>
    %58 = vector.broadcast %cst_13 : f32 to vector<8x64xf32>
    %59 = arith.select %45, %57, %58 : vector<8x64xi1>, vector<8x64xf32>
    %cst_14 = arith.constant dense<0.000000e+00> : vector<8xf32>
    %60 = vector.multi_reduction <add>, %59, %cst_14 [1] : vector<8x64xf32> to vector<8xf32>
    %61 = vector.shape_cast %60 : vector<8xf32> to vector<8x1xf32>
    %62 = arith.subf %61, %16 : vector<8x1xf32>
    %c0_15 = arith.constant 0 : index
    %c0_16 = arith.constant 0 : index
    %c1 = arith.constant 1 : index
    %63 = vector.load %arg5[%c0_15, %c0_16, %c1] : memref<1x8x24xf32, #tpu.memory_space<vmem>>, vector<1x8x1xf32>
    %64 = vector.shape_cast %63 : vector<1x8x1xf32> to vector<8x1xf32>
    %65 = vector.shape_cast %62 : vector<8x1xf32> to vector<1x8x1xf32>
    tpu.vector_store %arg5[%c0_15, %c0_16, %c1], %65 {strides = array<i32>} : memref<1x8x24xf32, #tpu.memory_space<vmem>>, vector<1x8x1xf32>,
    %cst_17 = arith.constant 0.000000e+00 : f32
    %66 = vector.shape_cast %14 : vector<1x64xf32> to vector<1x64xf32>
    %67 = vector.broadcast %66 : vector<1x64xf32> to vector<8x64xf32>
    %68 = vector.broadcast %cst_17 : f32 to vector<8x64xf32>
    %69 = arith.select %45, %67, %68 : vector<8x64xi1>, vector<8x64xf32>
    %cst_18 = arith.constant dense<0.000000e+00> : vector<8xf32>
    %70 = vector.multi_reduction <add>, %69, %cst_18 [1] : vector<8x64xf32> to vector<8xf32>
    %71 = vector.shape_cast %70 : vector<8xf32> to vector<8x1xf32>
    %72 = arith.subf %71, %17 : vector<8x1xf32>
    %c0_19 = arith.constant 0 : index
    %c0_20 = arith.constant 0 : index
    %c2 = arith.constant 2 : index
    %73 = vector.load %arg5[%c0_19, %c0_20, %c2] : memref<1x8x24xf32, #tpu.memory_space<vmem>>, vector<1x8x1xf32>
    %74 = vector.shape_cast %73 : vector<1x8x1xf32> to vector<8x1xf32>
    %75 = vector.shape_cast %72 : vector<8x1xf32> to vector<1x8x1xf32>
    tpu.vector_store %arg5[%c0_19, %c0_20, %c2], %75 {strides = array<i32>} : memref<1x8x24xf32, #tpu.memory_space<vmem>>, vector<1x8x1xf32>,
    %cst_21 = arith.constant 0x7F800000 : f32
    %76 = vector.broadcast %cst_21 : f32 to vector<8x64xf32>
    %77 = arith.select %45, %76, %31 : vector<8x64xi1>, vector<8x64xf32>
    %cst_22 = arith.constant dense<0x7F800000> : vector<8xf32>
    %78 = vector.multi_reduction <minimumf>, %77, %cst_22 [1] : vector<8x64xf32> to vector<8xf32>
    %79 = vector.shape_cast %78 : vector<8xf32> to vector<8x1xf32>
    %80 = vector.broadcast %79 : vector<8x1xf32> to vector<8x64xf32>
    %81 = arith.cmpf oeq, %77, %80 : vector<8x64xf32>
    %c64_i32_23 = arith.constant 64 : i32
    %82 = vector.shape_cast %32 : vector<1x64xi32> to vector<1x64xi32>
    %83 = vector.broadcast %82 : vector<1x64xi32> to vector<8x64xi32>
    %84 = vector.broadcast %c64_i32_23 : i32 to vector<8x64xi32>
    %85 = arith.select %81, %83, %84 : vector<8x64xi1>, vector<8x64xi32>
    %cst_24 = arith.constant dense<2147483647> : vector<8xi32>
    %86 = vector.multi_reduction <minsi>, %85, %cst_24 [1] : vector<8x64xi32> to vector<8xi32>
    %87 = vector.shape_cast %86 : vector<8xi32> to vector<8x1xi32>
    %88 = vector.broadcast %32 : vector<1x64xi32> to vector<8x64xi32>
    %89 = vector.broadcast %87 : vector<8x1xi32> to vector<8x64xi32>
    %90 = arith.cmpi eq, %88, %89 : vector<8x64xi32>
    %cst_25 = arith.constant 0.000000e+00 : f32
    %91 = vector.shape_cast %12 : vector<1x64xf32> to vector<1x64xf32>
    %92 = vector.broadcast %91 : vector<1x64xf32> to vector<8x64xf32>
    %93 = vector.broadcast %cst_25 : f32 to vector<8x64xf32>
    %94 = arith.select %90, %92, %93 : vector<8x64xi1>, vector<8x64xf32>
    %cst_26 = arith.constant dense<0.000000e+00> : vector<8xf32>
    %95 = vector.multi_reduction <add>, %94, %cst_26 [1] : vector<8x64xf32> to vector<8xf32>
    %96 = vector.shape_cast %95 : vector<8xf32> to vector<8x1xf32>
    %97 = arith.subf %96, %15 : vector<8x1xf32>
    %c0_27 = arith.constant 0 : index
    %c0_28 = arith.constant 0 : index
    %c3 = arith.constant 3 : index
    %98 = vector.load %arg5[%c0_27, %c0_28, %c3] : memref<1x8x24xf32, #tpu.memory_space<vmem>>, vector<1x8x1xf32>
    %99 = vector.shape_cast %98 : vector<1x8x1xf32> to vector<8x1xf32>
    %100 = vector.shape_cast %97 : vector<8x1xf32> to vector<1x8x1xf32>
    tpu.vector_store %arg5[%c0_27, %c0_28, %c3], %100 {strides = array<i32>} : memref<1x8x24xf32, #tpu.memory_space<vmem>>, vector<1x8x1xf32>,
    %cst_29 = arith.constant 0.000000e+00 : f32
    %101 = vector.shape_cast %13 : vector<1x64xf32> to vector<1x64xf32>
    %102 = vector.broadcast %101 : vector<1x64xf32> to vector<8x64xf32>
    %103 = vector.broadcast %cst_29 : f32 to vector<8x64xf32>
    %104 = arith.select %90, %102, %103 : vector<8x64xi1>, vector<8x64xf32>
    %cst_30 = arith.constant dense<0.000000e+00> : vector<8xf32>
    %105 = vector.multi_reduction <add>, %104, %cst_30 [1] : vector<8x64xf32> to vector<8xf32>
    %106 = vector.shape_cast %105 : vector<8xf32> to vector<8x1xf32>
    %107 = arith.subf %106, %16 : vector<8x1xf32>
    %c0_31 = arith.constant 0 : index
    %c0_32 = arith.constant 0 : index
    %c4 = arith.constant 4 : index
    %108 = vector.load %arg5[%c0_31, %c0_32, %c4] : memref<1x8x24xf32, #tpu.memory_space<vmem>>, vector<1x8x1xf32>
    %109 = vector.shape_cast %108 : vector<1x8x1xf32> to vector<8x1xf32>
    %110 = vector.shape_cast %107 : vector<8x1xf32> to vector<1x8x1xf32>
    tpu.vector_store %arg5[%c0_31, %c0_32, %c4], %110 {strides = array<i32>} : memref<1x8x24xf32, #tpu.memory_space<vmem>>, vector<1x8x1xf32>,
    %cst_33 = arith.constant 0.000000e+00 : f32
    %111 = vector.shape_cast %14 : vector<1x64xf32> to vector<1x64xf32>
    %112 = vector.broadcast %111 : vector<1x64xf32> to vector<8x64xf32>
    %113 = vector.broadcast %cst_33 : f32 to vector<8x64xf32>
    %114 = arith.select %90, %112, %113 : vector<8x64xi1>, vector<8x64xf32>
    %cst_34 = arith.constant dense<0.000000e+00> : vector<8xf32>
    %115 = vector.multi_reduction <add>, %114, %cst_34 [1] : vector<8x64xf32> to vector<8xf32>
    %116 = vector.shape_cast %115 : vector<8xf32> to vector<8x1xf32>
    %117 = arith.subf %116, %17 : vector<8x1xf32>
    %c0_35 = arith.constant 0 : index
    %c0_36 = arith.constant 0 : index
    %c5 = arith.constant 5 : index
    %118 = vector.load %arg5[%c0_35, %c0_36, %c5] : memref<1x8x24xf32, #tpu.memory_space<vmem>>, vector<1x8x1xf32>
    %119 = vector.shape_cast %118 : vector<1x8x1xf32> to vector<8x1xf32>
    %120 = vector.shape_cast %117 : vector<8x1xf32> to vector<1x8x1xf32>
    tpu.vector_store %arg5[%c0_35, %c0_36, %c5], %120 {strides = array<i32>} : memref<1x8x24xf32, #tpu.memory_space<vmem>>, vector<1x8x1xf32>,
    %cst_37 = arith.constant 0x7F800000 : f32
    %121 = vector.broadcast %cst_37 : f32 to vector<8x64xf32>
    %122 = arith.select %90, %121, %77 : vector<8x64xi1>, vector<8x64xf32>
    %cst_38 = arith.constant dense<0x7F800000> : vector<8xf32>
    %123 = vector.multi_reduction <minimumf>, %122, %cst_38 [1] : vector<8x64xf32> to vector<8xf32>
    %124 = vector.shape_cast %123 : vector<8xf32> to vector<8x1xf32>
    %125 = vector.broadcast %124 : vector<8x1xf32> to vector<8x64xf32>
    %126 = arith.cmpf oeq, %122, %125 : vector<8x64xf32>
    %c64_i32_39 = arith.constant 64 : i32
    %127 = vector.shape_cast %32 : vector<1x64xi32> to vector<1x64xi32>
    %128 = vector.broadcast %127 : vector<1x64xi32> to vector<8x64xi32>
    %129 = vector.broadcast %c64_i32_39 : i32 to vector<8x64xi32>
    %130 = arith.select %126, %128, %129 : vector<8x64xi1>, vector<8x64xi32>
    %cst_40 = arith.constant dense<2147483647> : vector<8xi32>
    %131 = vector.multi_reduction <minsi>, %130, %cst_40 [1] : vector<8x64xi32> to vector<8xi32>
    %132 = vector.shape_cast %131 : vector<8xi32> to vector<8x1xi32>
    %133 = vector.broadcast %32 : vector<1x64xi32> to vector<8x64xi32>
    %134 = vector.broadcast %132 : vector<8x1xi32> to vector<8x64xi32>
    %135 = arith.cmpi eq, %133, %134 : vector<8x64xi32>
    %cst_41 = arith.constant 0.000000e+00 : f32
    %136 = vector.shape_cast %12 : vector<1x64xf32> to vector<1x64xf32>
    %137 = vector.broadcast %136 : vector<1x64xf32> to vector<8x64xf32>
    %138 = vector.broadcast %cst_41 : f32 to vector<8x64xf32>
    %139 = arith.select %135, %137, %138 : vector<8x64xi1>, vector<8x64xf32>
    %cst_42 = arith.constant dense<0.000000e+00> : vector<8xf32>
    %140 = vector.multi_reduction <add>, %139, %cst_42 [1] : vector<8x64xf32> to vector<8xf32>
    %141 = vector.shape_cast %140 : vector<8xf32> to vector<8x1xf32>
    %142 = arith.subf %141, %15 : vector<8x1xf32>
    %c0_43 = arith.constant 0 : index
    %c0_44 = arith.constant 0 : index
    %c6 = arith.constant 6 : index
    %143 = vector.load %arg5[%c0_43, %c0_44, %c6] : memref<1x8x24xf32, #tpu.memory_space<vmem>>, vector<1x8x1xf32>
    %144 = vector.shape_cast %143 : vector<1x8x1xf32> to vector<8x1xf32>
    %145 = vector.shape_cast %142 : vector<8x1xf32> to vector<1x8x1xf32>
    tpu.vector_store %arg5[%c0_43, %c0_44, %c6], %145 {strides = array<i32>} : memref<1x8x24xf32, #tpu.memory_space<vmem>>, vector<1x8x1xf32>,
    %cst_45 = arith.constant 0.000000e+00 : f32
    %146 = vector.shape_cast %13 : vector<1x64xf32> to vector<1x64xf32>
    %147 = vector.broadcast %146 : vector<1x64xf32> to vector<8x64xf32>
    %148 = vector.broadcast %cst_45 : f32 to vector<8x64xf32>
    %149 = arith.select %135, %147, %148 : vector<8x64xi1>, vector<8x64xf32>
    %cst_46 = arith.constant dense<0.000000e+00> : vector<8xf32>
    %150 = vector.multi_reduction <add>, %149, %cst_46 [1] : vector<8x64xf32> to vector<8xf32>
    %151 = vector.shape_cast %150 : vector<8xf32> to vector<8x1xf32>
    %152 = arith.subf %151, %16 : vector<8x1xf32>
    %c0_47 = arith.constant 0 : index
    %c0_48 = arith.constant 0 : index
    %c7 = arith.constant 7 : index
    %153 = vector.load %arg5[%c0_47, %c0_48, %c7] : memref<1x8x24xf32, #tpu.memory_space<vmem>>, vector<1x8x1xf32>
    %154 = vector.shape_cast %153 : vector<1x8x1xf32> to vector<8x1xf32>
    %155 = vector.shape_cast %152 : vector<8x1xf32> to vector<1x8x1xf32>
    tpu.vector_store %arg5[%c0_47, %c0_48, %c7], %155 {strides = array<i32>} : memref<1x8x24xf32, #tpu.memory_space<vmem>>, vector<1x8x1xf32>,
    %cst_49 = arith.constant 0.000000e+00 : f32
    %156 = vector.shape_cast %14 : vector<1x64xf32> to vector<1x64xf32>
    %157 = vector.broadcast %156 : vector<1x64xf32> to vector<8x64xf32>
    %158 = vector.broadcast %cst_49 : f32 to vector<8x64xf32>
    %159 = arith.select %135, %157, %158 : vector<8x64xi1>, vector<8x64xf32>
    %cst_50 = arith.constant dense<0.000000e+00> : vector<8xf32>
    %160 = vector.multi_reduction <add>, %159, %cst_50 [1] : vector<8x64xf32> to vector<8xf32>
    %161 = vector.shape_cast %160 : vector<8xf32> to vector<8x1xf32>
    %162 = arith.subf %161, %17 : vector<8x1xf32>
    %c0_51 = arith.constant 0 : index
    %c0_52 = arith.constant 0 : index
    %c8 = arith.constant 8 : index
    %163 = vector.load %arg5[%c0_51, %c0_52, %c8] : memref<1x8x24xf32, #tpu.memory_space<vmem>>, vector<1x8x1xf32>
    %164 = vector.shape_cast %163 : vector<1x8x1xf32> to vector<8x1xf32>
    %165 = vector.shape_cast %162 : vector<8x1xf32> to vector<1x8x1xf32>
    tpu.vector_store %arg5[%c0_51, %c0_52, %c8], %165 {strides = array<i32>} : memref<1x8x24xf32, #tpu.memory_space<vmem>>, vector<1x8x1xf32>,
    %cst_53 = arith.constant 0x7F800000 : f32
    %166 = vector.broadcast %cst_53 : f32 to vector<8x64xf32>
    %167 = arith.select %135, %166, %122 : vector<8x64xi1>, vector<8x64xf32>
    %cst_54 = arith.constant dense<0x7F800000> : vector<8xf32>
    %168 = vector.multi_reduction <minimumf>, %167, %cst_54 [1] : vector<8x64xf32> to vector<8xf32>
    %169 = vector.shape_cast %168 : vector<8xf32> to vector<8x1xf32>
    %170 = vector.broadcast %169 : vector<8x1xf32> to vector<8x64xf32>
    %171 = arith.cmpf oeq, %167, %170 : vector<8x64xf32>
    %c64_i32_55 = arith.constant 64 : i32
    %172 = vector.shape_cast %32 : vector<1x64xi32> to vector<1x64xi32>
    %173 = vector.broadcast %172 : vector<1x64xi32> to vector<8x64xi32>
    %174 = vector.broadcast %c64_i32_55 : i32 to vector<8x64xi32>
    %175 = arith.select %171, %173, %174 : vector<8x64xi1>, vector<8x64xi32>
    %cst_56 = arith.constant dense<2147483647> : vector<8xi32>
    %176 = vector.multi_reduction <minsi>, %175, %cst_56 [1] : vector<8x64xi32> to vector<8xi32>
    %177 = vector.shape_cast %176 : vector<8xi32> to vector<8x1xi32>
    %178 = vector.broadcast %32 : vector<1x64xi32> to vector<8x64xi32>
    %179 = vector.broadcast %177 : vector<8x1xi32> to vector<8x64xi32>
    %180 = arith.cmpi eq, %178, %179 : vector<8x64xi32>
    %cst_57 = arith.constant 0.000000e+00 : f32
    %181 = vector.shape_cast %12 : vector<1x64xf32> to vector<1x64xf32>
    %182 = vector.broadcast %181 : vector<1x64xf32> to vector<8x64xf32>
    %183 = vector.broadcast %cst_57 : f32 to vector<8x64xf32>
    %184 = arith.select %180, %182, %183 : vector<8x64xi1>, vector<8x64xf32>
    %cst_58 = arith.constant dense<0.000000e+00> : vector<8xf32>
    %185 = vector.multi_reduction <add>, %184, %cst_58 [1] : vector<8x64xf32> to vector<8xf32>
    %186 = vector.shape_cast %185 : vector<8xf32> to vector<8x1xf32>
    %187 = arith.subf %186, %15 : vector<8x1xf32>
    %c0_59 = arith.constant 0 : index
    %c0_60 = arith.constant 0 : index
    %c9 = arith.constant 9 : index
    %188 = vector.load %arg5[%c0_59, %c0_60, %c9] : memref<1x8x24xf32, #tpu.memory_space<vmem>>, vector<1x8x1xf32>
    %189 = vector.shape_cast %188 : vector<1x8x1xf32> to vector<8x1xf32>
    %190 = vector.shape_cast %187 : vector<8x1xf32> to vector<1x8x1xf32>
    tpu.vector_store %arg5[%c0_59, %c0_60, %c9], %190 {strides = array<i32>} : memref<1x8x24xf32, #tpu.memory_space<vmem>>, vector<1x8x1xf32>,
    %cst_61 = arith.constant 0.000000e+00 : f32
    %191 = vector.shape_cast %13 : vector<1x64xf32> to vector<1x64xf32>
    %192 = vector.broadcast %191 : vector<1x64xf32> to vector<8x64xf32>
    %193 = vector.broadcast %cst_61 : f32 to vector<8x64xf32>
    %194 = arith.select %180, %192, %193 : vector<8x64xi1>, vector<8x64xf32>
    %cst_62 = arith.constant dense<0.000000e+00> : vector<8xf32>
    %195 = vector.multi_reduction <add>, %194, %cst_62 [1] : vector<8x64xf32> to vector<8xf32>
    %196 = vector.shape_cast %195 : vector<8xf32> to vector<8x1xf32>
    %197 = arith.subf %196, %16 : vector<8x1xf32>
    %c0_63 = arith.constant 0 : index
    %c0_64 = arith.constant 0 : index
    %c10 = arith.constant 10 : index
    %198 = vector.load %arg5[%c0_63, %c0_64, %c10] : memref<1x8x24xf32, #tpu.memory_space<vmem>>, vector<1x8x1xf32>
    %199 = vector.shape_cast %198 : vector<1x8x1xf32> to vector<8x1xf32>
    %200 = vector.shape_cast %197 : vector<8x1xf32> to vector<1x8x1xf32>
    tpu.vector_store %arg5[%c0_63, %c0_64, %c10], %200 {strides = array<i32>} : memref<1x8x24xf32, #tpu.memory_space<vmem>>, vector<1x8x1xf32>,
    %cst_65 = arith.constant 0.000000e+00 : f32
    %201 = vector.shape_cast %14 : vector<1x64xf32> to vector<1x64xf32>
    %202 = vector.broadcast %201 : vector<1x64xf32> to vector<8x64xf32>
    %203 = vector.broadcast %cst_65 : f32 to vector<8x64xf32>
    %204 = arith.select %180, %202, %203 : vector<8x64xi1>, vector<8x64xf32>
    %cst_66 = arith.constant dense<0.000000e+00> : vector<8xf32>
    %205 = vector.multi_reduction <add>, %204, %cst_66 [1] : vector<8x64xf32> to vector<8xf32>
    %206 = vector.shape_cast %205 : vector<8xf32> to vector<8x1xf32>
    %207 = arith.subf %206, %17 : vector<8x1xf32>
    %c0_67 = arith.constant 0 : index
    %c0_68 = arith.constant 0 : index
    %c11 = arith.constant 11 : index
    %208 = vector.load %arg5[%c0_67, %c0_68, %c11] : memref<1x8x24xf32, #tpu.memory_space<vmem>>, vector<1x8x1xf32>
    %209 = vector.shape_cast %208 : vector<1x8x1xf32> to vector<8x1xf32>
    %210 = vector.shape_cast %207 : vector<8x1xf32> to vector<1x8x1xf32>
    tpu.vector_store %arg5[%c0_67, %c0_68, %c11], %210 {strides = array<i32>} : memref<1x8x24xf32, #tpu.memory_space<vmem>>, vector<1x8x1xf32>,
    %cst_69 = arith.constant 0x7F800000 : f32
    %211 = vector.broadcast %cst_69 : f32 to vector<8x64xf32>
    %212 = arith.select %180, %211, %167 : vector<8x64xi1>, vector<8x64xf32>
    %cst_70 = arith.constant dense<0x7F800000> : vector<8xf32>
    %213 = vector.multi_reduction <minimumf>, %212, %cst_70 [1] : vector<8x64xf32> to vector<8xf32>
    %214 = vector.shape_cast %213 : vector<8xf32> to vector<8x1xf32>
    %215 = vector.broadcast %214 : vector<8x1xf32> to vector<8x64xf32>
    %216 = arith.cmpf oeq, %212, %215 : vector<8x64xf32>
    %c64_i32_71 = arith.constant 64 : i32
    %217 = vector.shape_cast %32 : vector<1x64xi32> to vector<1x64xi32>
    %218 = vector.broadcast %217 : vector<1x64xi32> to vector<8x64xi32>
    %219 = vector.broadcast %c64_i32_71 : i32 to vector<8x64xi32>
    %220 = arith.select %216, %218, %219 : vector<8x64xi1>, vector<8x64xi32>
    %cst_72 = arith.constant dense<2147483647> : vector<8xi32>
    %221 = vector.multi_reduction <minsi>, %220, %cst_72 [1] : vector<8x64xi32> to vector<8xi32>
    %222 = vector.shape_cast %221 : vector<8xi32> to vector<8x1xi32>
    %223 = vector.broadcast %32 : vector<1x64xi32> to vector<8x64xi32>
    %224 = vector.broadcast %222 : vector<8x1xi32> to vector<8x64xi32>
    %225 = arith.cmpi eq, %223, %224 : vector<8x64xi32>
    %cst_73 = arith.constant 0.000000e+00 : f32
    %226 = vector.shape_cast %12 : vector<1x64xf32> to vector<1x64xf32>
    %227 = vector.broadcast %226 : vector<1x64xf32> to vector<8x64xf32>
    %228 = vector.broadcast %cst_73 : f32 to vector<8x64xf32>
    %229 = arith.select %225, %227, %228 : vector<8x64xi1>, vector<8x64xf32>
    %cst_74 = arith.constant dense<0.000000e+00> : vector<8xf32>
    %230 = vector.multi_reduction <add>, %229, %cst_74 [1] : vector<8x64xf32> to vector<8xf32>
    %231 = vector.shape_cast %230 : vector<8xf32> to vector<8x1xf32>
    %232 = arith.subf %231, %15 : vector<8x1xf32>
    %c0_75 = arith.constant 0 : index
    %c0_76 = arith.constant 0 : index
    %c12 = arith.constant 12 : index
    %233 = vector.load %arg5[%c0_75, %c0_76, %c12] : memref<1x8x24xf32, #tpu.memory_space<vmem>>, vector<1x8x1xf32>
    %234 = vector.shape_cast %233 : vector<1x8x1xf32> to vector<8x1xf32>
    %235 = vector.shape_cast %232 : vector<8x1xf32> to vector<1x8x1xf32>
    tpu.vector_store %arg5[%c0_75, %c0_76, %c12], %235 {strides = array<i32>} : memref<1x8x24xf32, #tpu.memory_space<vmem>>, vector<1x8x1xf32>,
    %cst_77 = arith.constant 0.000000e+00 : f32
    %236 = vector.shape_cast %13 : vector<1x64xf32> to vector<1x64xf32>
    %237 = vector.broadcast %236 : vector<1x64xf32> to vector<8x64xf32>
    %238 = vector.broadcast %cst_77 : f32 to vector<8x64xf32>
    %239 = arith.select %225, %237, %238 : vector<8x64xi1>, vector<8x64xf32>
    %cst_78 = arith.constant dense<0.000000e+00> : vector<8xf32>
    %240 = vector.multi_reduction <add>, %239, %cst_78 [1] : vector<8x64xf32> to vector<8xf32>
    %241 = vector.shape_cast %240 : vector<8xf32> to vector<8x1xf32>
    %242 = arith.subf %241, %16 : vector<8x1xf32>
    %c0_79 = arith.constant 0 : index
    %c0_80 = arith.constant 0 : index
    %c13 = arith.constant 13 : index
    %243 = vector.load %arg5[%c0_79, %c0_80, %c13] : memref<1x8x24xf32, #tpu.memory_space<vmem>>, vector<1x8x1xf32>
    %244 = vector.shape_cast %243 : vector<1x8x1xf32> to vector<8x1xf32>
    %245 = vector.shape_cast %242 : vector<8x1xf32> to vector<1x8x1xf32>
    tpu.vector_store %arg5[%c0_79, %c0_80, %c13], %245 {strides = array<i32>} : memref<1x8x24xf32, #tpu.memory_space<vmem>>, vector<1x8x1xf32>,
    %cst_81 = arith.constant 0.000000e+00 : f32
    %246 = vector.shape_cast %14 : vector<1x64xf32> to vector<1x64xf32>
    %247 = vector.broadcast %246 : vector<1x64xf32> to vector<8x64xf32>
    %248 = vector.broadcast %cst_81 : f32 to vector<8x64xf32>
    %249 = arith.select %225, %247, %248 : vector<8x64xi1>, vector<8x64xf32>
    %cst_82 = arith.constant dense<0.000000e+00> : vector<8xf32>
    %250 = vector.multi_reduction <add>, %249, %cst_82 [1] : vector<8x64xf32> to vector<8xf32>
    %251 = vector.shape_cast %250 : vector<8xf32> to vector<8x1xf32>
    %252 = arith.subf %251, %17 : vector<8x1xf32>
    %c0_83 = arith.constant 0 : index
    %c0_84 = arith.constant 0 : index
    %c14 = arith.constant 14 : index
    %253 = vector.load %arg5[%c0_83, %c0_84, %c14] : memref<1x8x24xf32, #tpu.memory_space<vmem>>, vector<1x8x1xf32>
    %254 = vector.shape_cast %253 : vector<1x8x1xf32> to vector<8x1xf32>
    %255 = vector.shape_cast %252 : vector<8x1xf32> to vector<1x8x1xf32>
    tpu.vector_store %arg5[%c0_83, %c0_84, %c14], %255 {strides = array<i32>} : memref<1x8x24xf32, #tpu.memory_space<vmem>>, vector<1x8x1xf32>,
    %cst_85 = arith.constant 0x7F800000 : f32
    %256 = vector.broadcast %cst_85 : f32 to vector<8x64xf32>
    %257 = arith.select %225, %256, %212 : vector<8x64xi1>, vector<8x64xf32>
    %cst_86 = arith.constant dense<0x7F800000> : vector<8xf32>
    %258 = vector.multi_reduction <minimumf>, %257, %cst_86 [1] : vector<8x64xf32> to vector<8xf32>
    %259 = vector.shape_cast %258 : vector<8xf32> to vector<8x1xf32>
    %260 = vector.broadcast %259 : vector<8x1xf32> to vector<8x64xf32>
    %261 = arith.cmpf oeq, %257, %260 : vector<8x64xf32>
    %c64_i32_87 = arith.constant 64 : i32
    %262 = vector.shape_cast %32 : vector<1x64xi32> to vector<1x64xi32>
    %263 = vector.broadcast %262 : vector<1x64xi32> to vector<8x64xi32>
    %264 = vector.broadcast %c64_i32_87 : i32 to vector<8x64xi32>
    %265 = arith.select %261, %263, %264 : vector<8x64xi1>, vector<8x64xi32>
    %cst_88 = arith.constant dense<2147483647> : vector<8xi32>
    %266 = vector.multi_reduction <minsi>, %265, %cst_88 [1] : vector<8x64xi32> to vector<8xi32>
    %267 = vector.shape_cast %266 : vector<8xi32> to vector<8x1xi32>
    %268 = vector.broadcast %32 : vector<1x64xi32> to vector<8x64xi32>
    %269 = vector.broadcast %267 : vector<8x1xi32> to vector<8x64xi32>
    %270 = arith.cmpi eq, %268, %269 : vector<8x64xi32>
    %cst_89 = arith.constant 0.000000e+00 : f32
    %271 = vector.shape_cast %12 : vector<1x64xf32> to vector<1x64xf32>
    %272 = vector.broadcast %271 : vector<1x64xf32> to vector<8x64xf32>
    %273 = vector.broadcast %cst_89 : f32 to vector<8x64xf32>
    %274 = arith.select %270, %272, %273 : vector<8x64xi1>, vector<8x64xf32>
    %cst_90 = arith.constant dense<0.000000e+00> : vector<8xf32>
    %275 = vector.multi_reduction <add>, %274, %cst_90 [1] : vector<8x64xf32> to vector<8xf32>
    %276 = vector.shape_cast %275 : vector<8xf32> to vector<8x1xf32>
    %277 = arith.subf %276, %15 : vector<8x1xf32>
    %c0_91 = arith.constant 0 : index
    %c0_92 = arith.constant 0 : index
    %c15 = arith.constant 15 : index
    %278 = vector.load %arg5[%c0_91, %c0_92, %c15] : memref<1x8x24xf32, #tpu.memory_space<vmem>>, vector<1x8x1xf32>
    %279 = vector.shape_cast %278 : vector<1x8x1xf32> to vector<8x1xf32>
    %280 = vector.shape_cast %277 : vector<8x1xf32> to vector<1x8x1xf32>
    tpu.vector_store %arg5[%c0_91, %c0_92, %c15], %280 {strides = array<i32>} : memref<1x8x24xf32, #tpu.memory_space<vmem>>, vector<1x8x1xf32>,
    %cst_93 = arith.constant 0.000000e+00 : f32
    %281 = vector.shape_cast %13 : vector<1x64xf32> to vector<1x64xf32>
    %282 = vector.broadcast %281 : vector<1x64xf32> to vector<8x64xf32>
    %283 = vector.broadcast %cst_93 : f32 to vector<8x64xf32>
    %284 = arith.select %270, %282, %283 : vector<8x64xi1>, vector<8x64xf32>
    %cst_94 = arith.constant dense<0.000000e+00> : vector<8xf32>
    %285 = vector.multi_reduction <add>, %284, %cst_94 [1] : vector<8x64xf32> to vector<8xf32>
    %286 = vector.shape_cast %285 : vector<8xf32> to vector<8x1xf32>
    %287 = arith.subf %286, %16 : vector<8x1xf32>
    %c0_95 = arith.constant 0 : index
    %c0_96 = arith.constant 0 : index
    %c16 = arith.constant 16 : index
    %288 = vector.load %arg5[%c0_95, %c0_96, %c16] : memref<1x8x24xf32, #tpu.memory_space<vmem>>, vector<1x8x1xf32>
    %289 = vector.shape_cast %288 : vector<1x8x1xf32> to vector<8x1xf32>
    %290 = vector.shape_cast %287 : vector<8x1xf32> to vector<1x8x1xf32>
    tpu.vector_store %arg5[%c0_95, %c0_96, %c16], %290 {strides = array<i32>} : memref<1x8x24xf32, #tpu.memory_space<vmem>>, vector<1x8x1xf32>,
    %cst_97 = arith.constant 0.000000e+00 : f32
    %291 = vector.shape_cast %14 : vector<1x64xf32> to vector<1x64xf32>
    %292 = vector.broadcast %291 : vector<1x64xf32> to vector<8x64xf32>
    %293 = vector.broadcast %cst_97 : f32 to vector<8x64xf32>
    %294 = arith.select %270, %292, %293 : vector<8x64xi1>, vector<8x64xf32>
    %cst_98 = arith.constant dense<0.000000e+00> : vector<8xf32>
    %295 = vector.multi_reduction <add>, %294, %cst_98 [1] : vector<8x64xf32> to vector<8xf32>
    %296 = vector.shape_cast %295 : vector<8xf32> to vector<8x1xf32>
    %297 = arith.subf %296, %17 : vector<8x1xf32>
    %c0_99 = arith.constant 0 : index
    %c0_100 = arith.constant 0 : index
    %c17 = arith.constant 17 : index
    %298 = vector.load %arg5[%c0_99, %c0_100, %c17] : memref<1x8x24xf32, #tpu.memory_space<vmem>>, vector<1x8x1xf32>
    %299 = vector.shape_cast %298 : vector<1x8x1xf32> to vector<8x1xf32>
    %300 = vector.shape_cast %297 : vector<8x1xf32> to vector<1x8x1xf32>
    tpu.vector_store %arg5[%c0_99, %c0_100, %c17], %300 {strides = array<i32>} : memref<1x8x24xf32, #tpu.memory_space<vmem>>, vector<1x8x1xf32>,
    %cst_101 = arith.constant 0x7F800000 : f32
    %301 = vector.broadcast %cst_101 : f32 to vector<8x64xf32>
    %302 = arith.select %270, %301, %257 : vector<8x64xi1>, vector<8x64xf32>
    %cst_102 = arith.constant dense<0x7F800000> : vector<8xf32>
    %303 = vector.multi_reduction <minimumf>, %302, %cst_102 [1] : vector<8x64xf32> to vector<8xf32>
    %304 = vector.shape_cast %303 : vector<8xf32> to vector<8x1xf32>
    %305 = vector.broadcast %304 : vector<8x1xf32> to vector<8x64xf32>
    %306 = arith.cmpf oeq, %302, %305 : vector<8x64xf32>
    %c64_i32_103 = arith.constant 64 : i32
    %307 = vector.shape_cast %32 : vector<1x64xi32> to vector<1x64xi32>
    %308 = vector.broadcast %307 : vector<1x64xi32> to vector<8x64xi32>
    %309 = vector.broadcast %c64_i32_103 : i32 to vector<8x64xi32>
    %310 = arith.select %306, %308, %309 : vector<8x64xi1>, vector<8x64xi32>
    %cst_104 = arith.constant dense<2147483647> : vector<8xi32>
    %311 = vector.multi_reduction <minsi>, %310, %cst_104 [1] : vector<8x64xi32> to vector<8xi32>
    %312 = vector.shape_cast %311 : vector<8xi32> to vector<8x1xi32>
    %313 = vector.broadcast %32 : vector<1x64xi32> to vector<8x64xi32>
    %314 = vector.broadcast %312 : vector<8x1xi32> to vector<8x64xi32>
    %315 = arith.cmpi eq, %313, %314 : vector<8x64xi32>
    %cst_105 = arith.constant 0.000000e+00 : f32
    %316 = vector.shape_cast %12 : vector<1x64xf32> to vector<1x64xf32>
    %317 = vector.broadcast %316 : vector<1x64xf32> to vector<8x64xf32>
    %318 = vector.broadcast %cst_105 : f32 to vector<8x64xf32>
    %319 = arith.select %315, %317, %318 : vector<8x64xi1>, vector<8x64xf32>
    %cst_106 = arith.constant dense<0.000000e+00> : vector<8xf32>
    %320 = vector.multi_reduction <add>, %319, %cst_106 [1] : vector<8x64xf32> to vector<8xf32>
    %321 = vector.shape_cast %320 : vector<8xf32> to vector<8x1xf32>
    %322 = arith.subf %321, %15 : vector<8x1xf32>
    %c0_107 = arith.constant 0 : index
    %c0_108 = arith.constant 0 : index
    %c18 = arith.constant 18 : index
    %323 = vector.load %arg5[%c0_107, %c0_108, %c18] : memref<1x8x24xf32, #tpu.memory_space<vmem>>, vector<1x8x1xf32>
    %324 = vector.shape_cast %323 : vector<1x8x1xf32> to vector<8x1xf32>
    %325 = vector.shape_cast %322 : vector<8x1xf32> to vector<1x8x1xf32>
    tpu.vector_store %arg5[%c0_107, %c0_108, %c18], %325 {strides = array<i32>} : memref<1x8x24xf32, #tpu.memory_space<vmem>>, vector<1x8x1xf32>,
    %cst_109 = arith.constant 0.000000e+00 : f32
    %326 = vector.shape_cast %13 : vector<1x64xf32> to vector<1x64xf32>
    %327 = vector.broadcast %326 : vector<1x64xf32> to vector<8x64xf32>
    %328 = vector.broadcast %cst_109 : f32 to vector<8x64xf32>
    %329 = arith.select %315, %327, %328 : vector<8x64xi1>, vector<8x64xf32>
    %cst_110 = arith.constant dense<0.000000e+00> : vector<8xf32>
    %330 = vector.multi_reduction <add>, %329, %cst_110 [1] : vector<8x64xf32> to vector<8xf32>
    %331 = vector.shape_cast %330 : vector<8xf32> to vector<8x1xf32>
    %332 = arith.subf %331, %16 : vector<8x1xf32>
    %c0_111 = arith.constant 0 : index
    %c0_112 = arith.constant 0 : index
    %c19 = arith.constant 19 : index
    %333 = vector.load %arg5[%c0_111, %c0_112, %c19] : memref<1x8x24xf32, #tpu.memory_space<vmem>>, vector<1x8x1xf32>
    %334 = vector.shape_cast %333 : vector<1x8x1xf32> to vector<8x1xf32>
    %335 = vector.shape_cast %332 : vector<8x1xf32> to vector<1x8x1xf32>
    tpu.vector_store %arg5[%c0_111, %c0_112, %c19], %335 {strides = array<i32>} : memref<1x8x24xf32, #tpu.memory_space<vmem>>, vector<1x8x1xf32>,
    %cst_113 = arith.constant 0.000000e+00 : f32
    %336 = vector.shape_cast %14 : vector<1x64xf32> to vector<1x64xf32>
    %337 = vector.broadcast %336 : vector<1x64xf32> to vector<8x64xf32>
    %338 = vector.broadcast %cst_113 : f32 to vector<8x64xf32>
    %339 = arith.select %315, %337, %338 : vector<8x64xi1>, vector<8x64xf32>
    %cst_114 = arith.constant dense<0.000000e+00> : vector<8xf32>
    %340 = vector.multi_reduction <add>, %339, %cst_114 [1] : vector<8x64xf32> to vector<8xf32>
    %341 = vector.shape_cast %340 : vector<8xf32> to vector<8x1xf32>
    %342 = arith.subf %341, %17 : vector<8x1xf32>
    %c0_115 = arith.constant 0 : index
    %c0_116 = arith.constant 0 : index
    %c20 = arith.constant 20 : index
    %343 = vector.load %arg5[%c0_115, %c0_116, %c20] : memref<1x8x24xf32, #tpu.memory_space<vmem>>, vector<1x8x1xf32>
    %344 = vector.shape_cast %343 : vector<1x8x1xf32> to vector<8x1xf32>
    %345 = vector.shape_cast %342 : vector<8x1xf32> to vector<1x8x1xf32>
    tpu.vector_store %arg5[%c0_115, %c0_116, %c20], %345 {strides = array<i32>} : memref<1x8x24xf32, #tpu.memory_space<vmem>>, vector<1x8x1xf32>,
    %cst_117 = arith.constant 0x7F800000 : f32
    %346 = vector.broadcast %cst_117 : f32 to vector<8x64xf32>
    %347 = arith.select %315, %346, %302 : vector<8x64xi1>, vector<8x64xf32>
    %cst_118 = arith.constant dense<0x7F800000> : vector<8xf32>
    %348 = vector.multi_reduction <minimumf>, %347, %cst_118 [1] : vector<8x64xf32> to vector<8xf32>
    %349 = vector.shape_cast %348 : vector<8xf32> to vector<8x1xf32>
    %350 = vector.broadcast %349 : vector<8x1xf32> to vector<8x64xf32>
    %351 = arith.cmpf oeq, %347, %350 : vector<8x64xf32>
    %c64_i32_119 = arith.constant 64 : i32
    %352 = vector.shape_cast %32 : vector<1x64xi32> to vector<1x64xi32>
    %353 = vector.broadcast %352 : vector<1x64xi32> to vector<8x64xi32>
    %354 = vector.broadcast %c64_i32_119 : i32 to vector<8x64xi32>
    %355 = arith.select %351, %353, %354 : vector<8x64xi1>, vector<8x64xi32>
    %cst_120 = arith.constant dense<2147483647> : vector<8xi32>
    %356 = vector.multi_reduction <minsi>, %355, %cst_120 [1] : vector<8x64xi32> to vector<8xi32>
    %357 = vector.shape_cast %356 : vector<8xi32> to vector<8x1xi32>
    %358 = vector.broadcast %32 : vector<1x64xi32> to vector<8x64xi32>
    %359 = vector.broadcast %357 : vector<8x1xi32> to vector<8x64xi32>
    %360 = arith.cmpi eq, %358, %359 : vector<8x64xi32>
    %cst_121 = arith.constant 0.000000e+00 : f32
    %361 = vector.shape_cast %12 : vector<1x64xf32> to vector<1x64xf32>
    %362 = vector.broadcast %361 : vector<1x64xf32> to vector<8x64xf32>
    %363 = vector.broadcast %cst_121 : f32 to vector<8x64xf32>
    %364 = arith.select %360, %362, %363 : vector<8x64xi1>, vector<8x64xf32>
    %cst_122 = arith.constant dense<0.000000e+00> : vector<8xf32>
    %365 = vector.multi_reduction <add>, %364, %cst_122 [1] : vector<8x64xf32> to vector<8xf32>
    %366 = vector.shape_cast %365 : vector<8xf32> to vector<8x1xf32>
    %367 = arith.subf %366, %15 : vector<8x1xf32>
    %c0_123 = arith.constant 0 : index
    %c0_124 = arith.constant 0 : index
    %c21 = arith.constant 21 : index
    %368 = vector.load %arg5[%c0_123, %c0_124, %c21] : memref<1x8x24xf32, #tpu.memory_space<vmem>>, vector<1x8x1xf32>
    %369 = vector.shape_cast %368 : vector<1x8x1xf32> to vector<8x1xf32>
    %370 = vector.shape_cast %367 : vector<8x1xf32> to vector<1x8x1xf32>
    tpu.vector_store %arg5[%c0_123, %c0_124, %c21], %370 {strides = array<i32>} : memref<1x8x24xf32, #tpu.memory_space<vmem>>, vector<1x8x1xf32>,
    %cst_125 = arith.constant 0.000000e+00 : f32
    %371 = vector.shape_cast %13 : vector<1x64xf32> to vector<1x64xf32>
    %372 = vector.broadcast %371 : vector<1x64xf32> to vector<8x64xf32>
    %373 = vector.broadcast %cst_125 : f32 to vector<8x64xf32>
    %374 = arith.select %360, %372, %373 : vector<8x64xi1>, vector<8x64xf32>
    %cst_126 = arith.constant dense<0.000000e+00> : vector<8xf32>
    %375 = vector.multi_reduction <add>, %374, %cst_126 [1] : vector<8x64xf32> to vector<8xf32>
    %376 = vector.shape_cast %375 : vector<8xf32> to vector<8x1xf32>
    %377 = arith.subf %376, %16 : vector<8x1xf32>
    %c0_127 = arith.constant 0 : index
    %c0_128 = arith.constant 0 : index
    %c22 = arith.constant 22 : index
    %378 = vector.load %arg5[%c0_127, %c0_128, %c22] : memref<1x8x24xf32, #tpu.memory_space<vmem>>, vector<1x8x1xf32>
    %379 = vector.shape_cast %378 : vector<1x8x1xf32> to vector<8x1xf32>
    %380 = vector.shape_cast %377 : vector<8x1xf32> to vector<1x8x1xf32>
    tpu.vector_store %arg5[%c0_127, %c0_128, %c22], %380 {strides = array<i32>} : memref<1x8x24xf32, #tpu.memory_space<vmem>>, vector<1x8x1xf32>,
    %cst_129 = arith.constant 0.000000e+00 : f32
    %381 = vector.shape_cast %14 : vector<1x64xf32> to vector<1x64xf32>
    %382 = vector.broadcast %381 : vector<1x64xf32> to vector<8x64xf32>
    %383 = vector.broadcast %cst_129 : f32 to vector<8x64xf32>
    %384 = arith.select %360, %382, %383 : vector<8x64xi1>, vector<8x64xf32>
    %cst_130 = arith.constant dense<0.000000e+00> : vector<8xf32>
    %385 = vector.multi_reduction <add>, %384, %cst_130 [1] : vector<8x64xf32> to vector<8xf32>
    %386 = vector.shape_cast %385 : vector<8xf32> to vector<8x1xf32>
    %387 = arith.subf %386, %17 : vector<8x1xf32>
    %c0_131 = arith.constant 0 : index
    %c0_132 = arith.constant 0 : index
    %c23 = arith.constant 23 : index
    %388 = vector.load %arg5[%c0_131, %c0_132, %c23] : memref<1x8x24xf32, #tpu.memory_space<vmem>>, vector<1x8x1xf32>
    %389 = vector.shape_cast %388 : vector<1x8x1xf32> to vector<8x1xf32>
    %390 = vector.shape_cast %387 : vector<8x1xf32> to vector<1x8x1xf32>
    tpu.vector_store %arg5[%c0_131, %c0_132, %c23], %390 {strides = array<i32>} : memref<1x8x24xf32, #tpu.memory_space<vmem>>, vector<1x8x1xf32>,
    return
  }
  func.func @transform_0(%arg0: i32, %arg1: i32) -> (i32, i32, i32, i32) {
    %c0_i32 = arith.constant 0 : i32
    %c0_i32_0 = arith.constant 0 : i32
    %c0_i32_1 = arith.constant 0 : i32
    %c0_i32_2 = arith.constant 0 : i32
    return %arg0, %c0_i32, %c0_i32_0, %c0_i32_1 : i32, i32, i32, i32
  }
  func.func @transform_1(%arg0: i32, %arg1: i32) -> (i32, i32, i32) {
    %c0_i32 = arith.constant 0 : i32
    %c0_i32_0 = arith.constant 0 : i32
    %c0_i32_1 = arith.constant 0 : i32
    return %arg0, %c0_i32, %c0_i32_0 : i32, i32, i32
  }
  func.func @transform_2(%arg0: i32, %arg1: i32) -> (i32, i32, i32) {
    %c0_i32 = arith.constant 0 : i32
    %c0_i32_0 = arith.constant 0 : i32
    return %arg0, %arg1, %c0_i32 : i32, i32, i32
  }
  func.func @transform_3(%arg0: i32, %arg1: i32) -> (i32, i32, i32) {
    %c0_i32 = arith.constant 0 : i32
    %c0_i32_0 = arith.constant 0 : i32
    return %arg0, %arg1, %c0_i32 : i32, i32, i32
  }
}

</mosaic_0001>

<llo_original>
// kernel: tpu_custom_call.1
$region0: #{tpu_custom_call.1}
  #allocation0 [shape = 'u32[]', space=smem, size = 0x4, offset = 0x4, fixed_abs, tag = 'smem constant byte address 0x4 - core index']
  #allocation1 [shape = 'u32[144,128]{1,0:T(1,128)}', space=vmem, size = 0x12000, scoped, tag = 'internal scratch']
  #allocation2 [shape = 'f32[8,3]{1,0:T(8,128)}', space=vmem, size = 0x1000, scoped, tag = 'scratch operand']
  %s0 = inlined_call_operand.hbm [shape: f32[2,3,8,8], index: 0, kind: input, shape index: {}]
  %s1 = inlined_call_operand.vmem [shape: f32[2,3,64], index: 1, kind: input, shape index: {}]
  %s2 = inlined_call_operand.vmem [shape: f32[2,8,3], index: 2, kind: output, shape index: {0}]
  %s3 = inlined_call_operand.hbm [shape: f32[2,8,24], index: 3, kind: output, shape index: {1}]
  %4 = xla_tuple %s2, %s3
  %s5 = sld [smem:[#allocation0]]
  $region64: #{tpu_custom_call.1} parent=0
    _
  %s7 = ssub.s32 1, %s5
  %s8 = scalar_select 0, %s7, %s5
  $region1: #{tpu_custom_call.1} parent=0
    #allocation3 [shape = 'u8[24576]{0}', space=vmem, size = 0x6000, scoped, tag = 'input window, operand 0']
    #allocation4 [shape = 's32[2]{0}', space=sflag, size = 0x8, scoped, tag = 'scoped memory for tpu_custom_call.1']
    #allocation5 [shape = 's32[2]{0}', space=sflag, size = 0x8, scoped, tag = 'scoped memory for tpu_custom_call.1']
    #allocation6 [shape = 'u8[8192]{0}', space=vmem, size = 0x2000, scoped, tag = 'output window, operand 1']
    %9 = vsyncpa [#allocation4], 0
    %s10 = scalar_lea.sflag [#allocation4], 1
    %11 = vsyncpa %s10, 0
    %12 = vsyncpa [#allocation5], 0
    %s13 = scalar_lea.sflag [#allocation5], 1
    %14 = vsyncpa %s13, 0
    loop: start=0, step=1, limit=4
    $region2: #{tpu_custom_call.1} parent=1 // loop_pre_header
      _
    $region3: #{tpu_custom_call.1} parent=1 // loop_header
      %s16 = sphi 0, %s20
      %p17 = scmp.ge.s32.totalorder %s16, 4
      %s23 = sphi 0, %s35
      %s24 = sphi 0, %s31
      %s25 = sphi 0, %s23
      %s26 = sphi 0, %s24
      %s27 = sphi 0, %s25
      %s28 = sphi 0, %s26
      %s38 = sphi 0, %s40
      %s41 = sphi 0, %s38
      %s42 = sphi 0, %s41
      %s58 = sphi 0, %s42
      %s64 = sphi 0, %s66
      %s67 = sphi 0, %s64
      %s68 = sphi 0, %s67
      %s84 = sphi 0, %s68
      %s92 = sphi 0, %s94
      %s95 = sphi 0, %s92
      %s96 = sphi 0, %s95
      %s112 = sphi 0, %s96
      %s120 = sphi 0, %s122
      %s123 = sphi 0, %s120
      %s124 = sphi 0, %s123
      %s140 = sphi 0, %s124
    $region4: #{tpu_custom_call.1} parent=1 // loop_header_branch
      %19 = sbr.rel (%p17) target = $region8
    $region5: #{tpu_custom_call.1} parent=1 // loop_body
      %s21 = ssub.s32 %s16, 1
      %s22 = ssub.s32 %s16, 2
      %s29 = sadd.s32 1, %s24
      %p30 = scmp.ge.s32.totalorder %s29, 1
      %s31 = scalar_select %p30, 0, %s29
      %s32 = sadd.s32 1, %s23
      %s33 = scalar_select %p30, %s32, %s23
      %p34 = scmp.ge.s32.totalorder %s33, 2
      %s35 = scalar_select %p34, 0, %s33
      %s36 = ssub.s32 %s23, %s35
      %p37 = scmp.eq.s32.totalorder %s36, 0
      %s39 = sadd.s32 %s38, 1
      %s40 = scalar_select %p37, %s38, %s39
      %p43 = pneg %p37
      %p44 = scmp.eq.s32.totalorder %s16, 1
      %p45 = por %p43, %p44
      %p46 = scmp.ne.s32.totalorder %s38, %s41
      %p47 = scmp.eq.s32.totalorder %s16, 0
      %p48 = por %p46, %p47
      %p49 = scmp.ne.s32.totalorder %s38, %s41
      %p50 = scmp.eq.s32.totalorder %s21, 1
      %p51 = por %p49, %p50
      %p52 = scmp.ne.s32.totalorder %s41, %s42
      %p53 = scmp.eq.s32.totalorder %s21, 0
      %p54 = por %p52, %p53
      %p55 = scmp.ne.s32.totalorder %s41, %s42
      %p56 = scmp.eq.s32.totalorder %s22, 1
      %p57 = por %p55, %p56
      %p59 = scmp.ne.s32.totalorder %s42, %s58
      %p60 = scmp.eq.s32.totalorder %s22, 0
      %p61 = por %p59, %p60
      %s62 = ssub.s32 %s23, %s35
      %p63 = scmp.eq.s32.totalorder %s62, 0
      %s65 = sadd.s32 %s64, 1
      %s66 = scalar_select %p63, %s64, %s65
      %p69 = pneg %p63
      %p70 = scmp.eq.s32.totalorder %s16, 1
      %p71 = por %p69, %p70
      %p72 = scmp.ne.s32.totalorder %s64, %s67
      %p73 = scmp.eq.s32.totalorder %s16, 0
      %p74 = por %p72, %p73
      %p75 = scmp.ne.s32.totalorder %s64, %s67
      %p76 = scmp.eq.s32.totalorder %s21, 1
      %p77 = por %p75, %p76
      %p78 = scmp.ne.s32.totalorder %s67, %s68
      %p79 = scmp.eq.s32.totalorder %s21, 0
      %p80 = por %p78, %p79
      %p81 = scmp.ne.s32.totalorder %s67, %s68
      %p82 = scmp.eq.s32.totalorder %s22, 1
      %p83 = por %p81, %p82
      %p85 = scmp.ne.s32.totalorder %s68, %s84
      %p86 = scmp.eq.s32.totalorder %s22, 0
      %p87 = por %p85, %p86
      %s88 = ssub.s32 %s23, %s35
      %s89 = ssub.s32 %s24, %s31
      %s90 = sor.u32 %s88, %s89
      %p91 = scmp.eq.s32.totalorder %s90, 0
      %s93 = sadd.s32 %s92, 1
      %s94 = scalar_select %p91, %s92, %s93
      %p97 = pneg %p91
      %p98 = scmp.eq.s32.totalorder %s16, 1
      %p99 = por %p97, %p98
      %p100 = scmp.ne.s32.totalorder %s92, %s95
      %p101 = scmp.eq.s32.totalorder %s16, 0
      %p102 = por %p100, %p101
      %p103 = scmp.ne.s32.totalorder %s92, %s95
      %p104 = scmp.eq.s32.totalorder %s21, 1
      %p105 = por %p103, %p104
      %p106 = scmp.ne.s32.totalorder %s95, %s96
      %p107 = scmp.eq.s32.totalorder %s21, 0
      %p108 = por %p106, %p107
      %p109 = scmp.ne.s32.totalorder %s95, %s96
      %p110 = scmp.eq.s32.totalorder %s22, 1
      %p111 = por %p109, %p110
      %p113 = scmp.ne.s32.totalorder %s96, %s112
      %p114 = scmp.eq.s32.totalorder %s22, 0
      %p115 = por %p113, %p114
      %s116 = ssub.s32 %s23, %s35
      %s117 = ssub.s32 %s24, %s31
      %s118 = sor.u32 %s116, %s117
      %p119 = scmp.eq.s32.totalorder %s118, 0
      %s121 = sadd.s32 %s120, 1
      %s122 = scalar_select %p119, %s120, %s121
      %p125 = pneg %p119
      %p126 = scmp.eq.s32.totalorder %s16, 1
      %p127 = por %p125, %p126
      %p128 = scmp.ne.s32.totalorder %s120, %s123
      %p129 = scmp.eq.s32.totalorder %s16, 0
      %p130 = por %p128, %p129
      %p131 = scmp.ne.s32.totalorder %s120, %s123
      %p132 = scmp.eq.s32.totalorder %s21, 1
      %p133 = por %p131, %p132
      %p134 = scmp.ne.s32.totalorder %s123, %s124
      %p135 = scmp.eq.s32.totalorder %s21, 0
      %p136 = por %p134, %p135
      %p137 = scmp.ne.s32.totalorder %s123, %s124
      %p138 = scmp.eq.s32.totalorder %s22, 1
      %p139 = por %p137, %p138
      %p141 = scmp.ne.s32.totalorder %s124, %s140
      %p142 = scmp.eq.s32.totalorder %s22, 0
      %p143 = por %p141, %p142
      %p144 = scmp.le.s32.totalorder 1, %s16
      %p145 = scmp.lt.s32.totalorder %s16, 3
      %p146 = pnand %p144, %p145
      %p147 = pneg %p146
      // Predicated region
      $region9: #{tpu_custom_call.1} parent=5 // pred_check
        _
      $region10: #{tpu_custom_call.1} parent=5 // pred_check_branch
        %149 = sbr.rel (%p146) target = $region12
      $region11: #{tpu_custom_call.1} parent=5 // pred_region
        %s150 = ssub.s32 %s16, 1
      $region12: #{tpu_custom_call.1} parent=5 // pred_fallthru
        _
      %p151 = scmp.lt.s32.totalorder %s16, 2
      // Predicated region
      $region13: #{tpu_custom_call.1} parent=5 // pred_check
        %p152 = pneg %p151
      $region14: #{tpu_custom_call.1} parent=5 // pred_check_branch
        %154 = sbr.rel (%p152) target = $region16
      $region15: #{tpu_custom_call.1} parent=5 // pred_region
        // Predicated region
        $region17: #{tpu_custom_call.1} parent=15 // pred_check
          %p155 = pneg %p48
        $region18: #{tpu_custom_call.1} parent=15 // pred_check_branch
          %157 = sbr.rel (%p155) target = $region20
        $region19: #{tpu_custom_call.1} parent=15 // pred_region
          %s158 = sand.u32 %s38, 1
          %s159 = scalar_lea.sflag [#allocation4], %s158
          %s160 = sand.u32 %s38, 1
          %s161 = smul.addr %s160, 24
          %s162 = scalar_lea.vmem [#allocation3], %s161
          %s164 = ssub.s32 384, 384
          %165 = vsyncadd %s159, %s164
          %s166 = smul.addr %s23, 3
          %s167 = smul.addr %s166, 128
          %s168 = scalar_lea.hbm %s0, %s167
          %s169 = sshll.u32 %s162, 4
          %s170 = int_to_ptr.vmem [resolvable:$true] %s169
          %175 = dma.hbm_to_vmem [thread:$0]  %s168, 384, %s170, %s159, 128, 128, 8
        $region20: #{tpu_custom_call.1} parent=15 // pred_fallthru
          _
        // Predicated region
        $region21: #{tpu_custom_call.1} parent=15 // pred_check
          %p176 = pneg %p74
        $region22: #{tpu_custom_call.1} parent=15 // pred_check_branch
          %178 = sbr.rel (%p176) target = $region24
        $region23: #{tpu_custom_call.1} parent=15 // pred_region
          %p179 = scmp.lt.s32.totalorder %s23, 1
          %s180 = scalar_select %p179, %s23, 1
          %s181 = smul.addr %s180, 4
          %s182 = scalar_lea.vmem %s1, %s181
        $region24: #{tpu_custom_call.1} parent=15 // pred_fallthru
          _
      $region16: #{tpu_custom_call.1} parent=5 // pred_fallthru
        _
      %p183 = scmp.le.s32.totalorder 1, %s16
      %p184 = scmp.lt.s32.totalorder %s16, 3
      %p185 = pnand %p183, %p184
      %p186 = pneg %p185
      // Predicated region
      $region25: #{tpu_custom_call.1} parent=5 // pred_check
        _
      $region26: #{tpu_custom_call.1} parent=5 // pred_check_branch
        %188 = sbr.rel (%p185) target = $region28
      $region27: #{tpu_custom_call.1} parent=5 // pred_region
        %s189 = ssub.s32 %s16, 1
        %s190 = sand.u32 %s41, 1
        %s191 = scalar_lea.sflag [#allocation4], %s190
        %s192 = sand.u32 %s41, 1
        %s193 = smul.addr %s192, 24
        %s194 = scalar_lea.vmem [#allocation3], %s193
        // Predicated region
        $region29: #{tpu_custom_call.1} parent=27 // pred_check
          %p195 = pneg %p54
        $region30: #{tpu_custom_call.1} parent=27 // pred_check_branch
          %197 = sbr.rel (%p195) target = $region32
        $region31: #{tpu_custom_call.1} parent=27 // pred_region
          %198 = dma.done %s191, 384
        $region32: #{tpu_custom_call.1} parent=27 // pred_fallthru
          _
        %s199 = sand.u32 %s41, 1
        %s200 = scalar_lea.sflag [#allocation4], %s199
        %s201 = sand.u32 %s41, 1
        %s202 = smul.addr %s201, 24
        %s203 = scalar_lea.vmem [#allocation3], %s202
        %p204 = pneg %p54
        %p205 = pneg %p51
        %p206 = scmp.lt.s32.totalorder %s25, 1
        %s207 = scalar_select %p206, %s25, 1
        %s208 = smul.addr %s207, 4
        %s209 = scalar_lea.vmem %s1, %s208
        %p210 = pneg %p80
        %p211 = pneg %p77
        %p212 = pneg %p108
        %p213 = pneg %p105
        %p214 = scmp.lt.s32.totalorder %s25, 1
        %s215 = scalar_select %p214, %s25, 1
        %p216 = scmp.lt.s32.totalorder %s26, 0
        %s217 = scalar_select %p216, %s26, 0
        %s218 = sadd.s32 %s217, %s215
        %s219 = smul.addr %s218, 8
        %s220 = scalar_lea.vmem %s2, %s219
        %p221 = pneg %p136
        %p222 = pneg %p133
        %s223 = sand.u32 %s123, 1
        %s224 = scalar_lea.sflag [#allocation5], %s223
        %s225 = sand.u32 %s123, 1
        %s226 = smul.addr %s225, 8
        %s227 = scalar_lea.vmem [#allocation6], %s226
        %p228 = scmp.lt.s32.totalorder %s25, 1
        %s229 = scalar_select %p228, %s25, 1
        %s230 = smul.addr %s229, 4
        %s231 = scalar_lea.vmem %s1, %s230
        %p232 = scmp.lt.s32.totalorder %s25, 1
        %s233 = scalar_select %p232, %s25, 1
        %p234 = scmp.lt.s32.totalorder %s26, 0
        %s235 = scalar_select %p234, %s26, 0
        %s236 = sadd.s32 %s235, %s233
        %s237 = smul.addr %s236, 8
        %s238 = scalar_lea.vmem %s2, %s237
        %p239 = scmp.eq.s32.totalorder %s26, 0
        // Predicated region
        $region33: #{tpu_custom_call.1} parent=27 // pred_check
          %p240 = pneg %p239
        $region34: #{tpu_custom_call.1} parent=27 // pred_check_branch
          %242 = sbr.rel (%p240) target = $region36
        $region35: #{tpu_custom_call.1} parent=27 // pred_region
          %v243 = vld [vmem:[%s194] sm:$0xff]
          %v244 = vld [vmem:[%s194 + $0x8] sm:$0xff]
          %v245 = vld [vmem:[%s194 + $0x10] sm:$0xff]
          %v246 = vlaneseq
          %v247 = vshrl.u32 %v246, 7
          %v248 = vmul.u32 %v247, 8
          %v249 = vlaneseq
          %v250 = vand.u32 %v249, 127
          %v251 = vadd.s32 %v248, %v250
          loop: start=0, step=1, limit=8
          $region37: #{tpu_custom_call.1} parent=35 // loop_pre_header
            _
          $region38: #{tpu_custom_call.1} parent=35 // loop_header
            %s253 = sphi 0, %s257
            %p254 = scmp.ge.s32.totalorder %s253, 8
            %v258 = vphi inf, %v314
            %s259 = sphi 0, %s352
          $region39: #{tpu_custom_call.1} parent=35 // loop_header_branch
            %256 = sbr.rel (%p254) target = $region43
          $region40: #{tpu_custom_call.1} parent=35 // loop_body
            %v260 = vstv %s259
            %vm261 = vcmp.eq.s32.totalorder %v251, %v260
            %v262 = vsel %vm261, %v243, 0.0
            %vm263 = vcmask 64512
            %v264 = vsel %vm263, %v262, 0.0
            %265 = vadd.xlane.f32.xlu0 %v264
            %v266 = vpop.xlane.xlu0 %265
            %v267 = vrot.slane %v266, 4
            %v268 = vadd.f32 %v266, %v267
            %v269 = vrot.slane %v268, 2
            %v270 = vadd.f32 %v268, %v269
            %v271 = vrot.slane %v270, 1
            %v272 = vadd.f32 %v270, %v271
            %s273 = vtos %v272
            %v274 = vstv %s273
            %s275 = scalar_lea.vmem [#allocation2], %s253
            %vm276 = vcmask 0
            %277 = vst.msk [vmem:[%s275] sm:$0x1] %vm276, %v274
            %v278 = vsub.f32 %v243, %v274
            %v279 = vmul.f32 %v278, %v278
            %v280 = vsel %vm261, %v244, 0.0
            %v281 = vsel %vm263, %v280, 0.0
            %282 = vadd.xlane.f32.xlu0 %v281
            %v283 = vpop.xlane.xlu0 %282
            %v284 = vrot.slane %v283, 4
            %v285 = vadd.f32 %v283, %v284
            %v286 = vrot.slane %v285, 2
            %v287 = vadd.f32 %v285, %v286
            %v288 = vrot.slane %v287, 1
            %v289 = vadd.f32 %v287, %v288
            %s290 = vtos %v289
            %v291 = vstv %s290
            %vm292 = vcmask 8200
            %293 = vst.msk [vmem:[%s275] sm:$0x1] %vm292, %v291
            %v294 = vsub.f32 %v244, %v291
            %v295 = vmul.f32 %v294, %v294
            %v296 = vadd.f32 %v279, %v295
            %v297 = vsel %vm261, %v245, 0.0
            %v298 = vsel %vm263, %v297, 0.0
            %299 = vadd.xlane.f32.xlu0 %v298
            %v300 = vpop.xlane.xlu0 %299
            %v301 = vrot.slane %v300, 4
            %v302 = vadd.f32 %v300, %v301
            %v303 = vrot.slane %v302, 2
            %v304 = vadd.f32 %v302, %v303
            %v305 = vrot.slane %v304, 1
            %v306 = vadd.f32 %v304, %v305
            %s307 = vtos %v306
            %v308 = vstv %s307
            %vm309 = vcmask 16400
            %310 = vst.msk [vmem:[%s275] sm:$0x1] %vm309, %v308
            %v311 = vsub.f32 %v245, %v308
            %v312 = vmul.f32 %v311, %v311
            %v313 = vadd.f32 %v296, %v312
            %v314 = vmin.f32 %v258, %v313
            %v315 = vsel %vm263, %v314, -inf
            %316 = vmax.xlane.f32.xlu0 %v315
            %v317 = vpop.xlane.xlu0 %316
            %v318 = vrot.slane %v317, 4
            %v319 = vmax.f32 %v317, %v318
            %v320 = vrot.slane %v319, 2
            %v321 = vmax.f32 %v319, %v320
            %v322 = vrot.slane %v321, 1
            %v323 = vmax.f32 %v321, %v322
            %s324 = vtos %v323
            %v325 = vstv %s324
            %vm326 = vcmp.eq.f32.partialorder %v314, %v325
            %v327 = vsel %vm326, %v251, 64
            %v328 = vsel %vm263, %v327, 2147483647
            %v329 = vand.u32 %v328, 65535
            %v330 = vshra.s32 %v328, 16
            %v331 = vcvt.s32.f32 %v329
            %v332 = vcvt.s32.f32 %v330
            %333 = vmin.xlane.f32.xlu0 %v332
            %v334 = vpop.xlane.xlu0 %333
            %vm335 = vcmp.eq.f32.partialorder %v332, %v334
            %v336 = vsel %vm335, %v331, inf
            %337 = vmin.xlane.f32.xlu0 %v336
            %v338 = vpop.xlane.xlu0 %337
            %v339 = vcvt.f32.s32 %v338
            %v340 = vcvt.f32.s32 %v334
            %v341 = vshll.u32 %v340, 16
            %v342 = vadd.s32 %v341, %v339
            %v343 = vrot.slane %v342, 4
            %vm344 = vcmp.lt.s32.totalorder %v342, %v343
            %v345 = vsel %vm344, %v342, %v343
            %v346 = vrot.slane %v345, 2
            %vm347 = vcmp.lt.s32.totalorder %v345, %v346
            %v348 = vsel %vm347, %v345, %v346
            %v349 = vrot.slane %v348, 1
            %vm350 = vcmp.lt.s32.totalorder %v348, %v349
            %v351 = vsel %vm350, %v348, %v349
            %s352 = vtos %v351
          $region41: #{tpu_custom_call.1} parent=35 // loop_footer
            %s257 = sadd.s32 1, %s253
          $region42: #{tpu_custom_call.1} parent=35 // loop_footer_branch
            %252 = sbr.rel target = $region38
          $region43: #{tpu_custom_call.1} parent=35 // loop_exit
            _
        $region36: #{tpu_custom_call.1} parent=27 // pred_fallthru
          _
        %s353 = smul.u32 %s26, 8
        %s354 = scalar_lea.vmem [#allocation2], %s353
        %v355 = vld [vmem:[%s354] sm:$0xff]
        %vm356 = vcmask 23552
        %357 = vst.msk [vmem:[%s238] sm:$0xff] %vm356, %v355
        %v358 = vld [vmem:[%s231] sm:$0x7]
        %360 = vset.pattern.permute.xlu0 0
        %361 = vperm.xlu0 %360, %v355
        %v362 = vpop.permute.xlu0 %361
        %v364 = vlaneseq
        %v365 = vshrl.u32 %v364, 7
        %v366 = vsub.s32 0, %v365
        %v367 = vrot.slane %v358, %v366
        %v368 = vsub.f32 %v362, %v367
        %v369 = vmul.f32 %v368, %v368
        %370 = vset.pattern.permute.xlu0 1
        %371 = vperm.xlu0 %370, %v355
        %v372 = vpop.permute.xlu0 %371
        %v374 = vlaneseq
        %v375 = vshrl.u32 %v374, 7
        %v376 = vsub.s32 1, %v375
        %v377 = vrot.slane %v358, %v376
        %v378 = vsub.f32 %v372, %v377
        %v379 = vmul.f32 %v378, %v378
        %v380 = vadd.f32 %v369, %v379
        %381 = vset.pattern.permute.xlu0 2
        %382 = vperm.xlu0 %381, %v355
        %v383 = vpop.permute.xlu0 %382
        %v385 = vlaneseq
        %v386 = vshrl.u32 %v385, 7
        %v387 = vsub.s32 2, %v386
        %v388 = vrot.slane %v358, %v387
        %v389 = vsub.f32 %v383, %v388
        %v390 = vmul.f32 %v389, %v389
        %v391 = vadd.f32 %v380, %v390
        %v392 = vlaneseq
        %v393 = vand.u32 %v392, 127
        %vm394 = vcmask 523264
        %v395 = vsel %vm394, %v391, inf
        %396 = vmin.xlane.f32.xlu0 %v395
        %v397 = vpop.xlane.xlu0 %396
        %vm398 = vcmp.eq.f32.partialorder %v391, %v397
        %v399 = vsel %vm398, %v393, 64
        %v400 = vsel %vm394, %v399, 2147483647
        %v401 = vand.u32 %v400, 65535
        %v402 = vshra.s32 %v400, 16
        %v403 = vcvt.s32.f32 %v401
        %v404 = vcvt.s32.f32 %v402
        %405 = vmin.xlane.f32.xlu0 %v404
        %v406 = vpop.xlane.xlu0 %405
        %vm407 = vcmp.eq.f32.partialorder %v404, %v406
        %v408 = vsel %vm407, %v403, inf
        %409 = vmin.xlane.f32.xlu0 %v408
        %v410 = vpop.xlane.xlu0 %409
        %v411 = vcvt.f32.s32 %v410
        %v412 = vcvt.f32.s32 %v406
        %v413 = vshll.u32 %v412, 16
        %v414 = vadd.s32 %v413, %v411
        %vm415 = vcmp.eq.s32.totalorder %v393, %v414
        %v416 = vsel %vm415, %v367, 0.0
        %v417 = vsel %vm394, %v416, 0.0
        %418 = vadd.xlane.f32.xlu0 %v417
        %v419 = vpop.xlane.xlu0 %418
        %v420 = vsub.f32 %v419, %v355
        %vm421 = vcmask 7168
        %422 = vst.msk [vmem:[%s227] sm:$0xff] %vm421, %v420
        %v423 = vsel %vm415, %v377, 0.0
        %v424 = vsel %vm394, %v423, 0.0
        %425 = vadd.xlane.f32.xlu0 %v424
        %v426 = vpop.xlane.xlu0 %425
        %v427 = vsub.f32 %v426, %v355
        %vm428 = vcmask 15368
        %429 = vst.msk [vmem:[%s227] sm:$0xff] %vm428, %v427
        %v430 = vsel %vm415, %v388, 0.0
        %v431 = vsel %vm394, %v430, 0.0
        %432 = vadd.xlane.f32.xlu0 %v431
        %v433 = vpop.xlane.xlu0 %432
        %v434 = vsub.f32 %v433, %v355
        %vm435 = vcmask 23568
        %436 = vst.msk [vmem:[%s227] sm:$0xff] %vm435, %v434
        %v437 = vsel %vm415, inf, %v391
        %v438 = vsel %vm394, %v437, inf
        %439 = vmin.xlane.f32.xlu0 %v438
        %v440 = vpop.xlane.xlu0 %439
        %vm441 = vcmp.eq.f32.partialorder %v437, %v440
        %v442 = vsel %vm441, %v393, 64
        %v443 = vsel %vm394, %v442, 2147483647
        %v444 = vand.u32 %v443, 65535
        %v445 = vshra.s32 %v443, 16
        %v446 = vcvt.s32.f32 %v444
        %v447 = vcvt.s32.f32 %v445
        %448 = vmin.xlane.f32.xlu0 %v447
        %v449 = vpop.xlane.xlu0 %448
        %vm450 = vcmp.eq.f32.partialorder %v447, %v449
        %v451 = vsel %vm450, %v446, inf
        %452 = vmin.xlane.f32.xlu0 %v451
        %v453 = vpop.xlane.xlu0 %452
        %v454 = vcvt.f32.s32 %v453
        %v455 = vcvt.f32.s32 %v449
        %v456 = vshll.u32 %v455, 16
        %v457 = vadd.s32 %v456, %v454
        %vm458 = vcmp.eq.s32.totalorder %v393, %v457
        %v459 = vsel %vm458, %v367, 0.0
        %v460 = vsel %vm394, %v459, 0.0
        %461 = vadd.xlane.f32.xlu0 %v460
        %v462 = vpop.xlane.xlu0 %461
        %v463 = vsub.f32 %v462, %v355
        %465 = vrot.lane.b32.xlu0 %v463, 3
        %v466 = vpop.permute.xlu0 %465
        %vm468 = vcmask 31768
        %469 = vst.msk [vmem:[%s227] sm:$0xff] %vm468, %v466
        %v470 = vsel %vm458, %v377, 0.0
        %v471 = vsel %vm394, %v470, 0.0
        %472 = vadd.xlane.f32.xlu0 %v471
        %v473 = vpop.xlane.xlu0 %472
        %v474 = vsub.f32 %v473, %v355
        %476 = vrot.lane.b32.xlu0 %v474, 3
        %v477 = vpop.permute.xlu0 %476
        %vm479 = vcmask 39968
        %480 = vst.msk [vmem:[%s227] sm:$0xff] %vm479, %v477
        %v481 = vsel %vm458, %v388, 0.0
        %v482 = vsel %vm394, %v481, 0.0
        %483 = vadd.xlane.f32.xlu0 %v482
        %v484 = vpop.xlane.xlu0 %483
        %v485 = vsub.f32 %v484, %v355
        %487 = vrot.lane.b32.xlu0 %v485, 3
        %v488 = vpop.permute.xlu0 %487
        %vm490 = vcmask 48168
        %491 = vst.msk [vmem:[%s227] sm:$0xff] %vm490, %v488
        %v492 = vsel %vm458, inf, %v437
        %v493 = vsel %vm394, %v492, inf
        %494 = vmin.xlane.f32.xlu0 %v493
        %v495 = vpop.xlane.xlu0 %494
        %vm496 = vcmp.eq.f32.partialorder %v492, %v495
        %v497 = vsel %vm496, %v393, 64
        %v498 = vsel %vm394, %v497, 2147483647
        %v499 = vand.u32 %v498, 65535
        %v500 = vshra.s32 %v498, 16
        %v501 = vcvt.s32.f32 %v499
        %v502 = vcvt.s32.f32 %v500
        %503 = vmin.xlane.f32.xlu0 %v502
        %v504 = vpop.xlane.xlu0 %503
        %vm505 = vcmp.eq.f32.partialorder %v502, %v504
        %v506 = vsel %vm505, %v501, inf
        %507 = vmin.xlane.f32.xlu0 %v506
        %v508 = vpop.xlane.xlu0 %507
        %v509 = vcvt.f32.s32 %v508
        %v510 = vcvt.f32.s32 %v504
        %v511 = vshll.u32 %v510, 16
        %v512 = vadd.s32 %v511, %v509
        %vm513 = vcmp.eq.s32.totalorder %v393, %v512
        %v514 = vsel %vm513, %v367, 0.0
        %v515 = vsel %vm394, %v514, 0.0
        %516 = vadd.xlane.f32.xlu0 %v515
        %v517 = vpop.xlane.xlu0 %516
        %v518 = vsub.f32 %v517, %v355
        %520 = vrot.lane.b32.xlu0 %v518, 6
        %v521 = vpop.permute.xlu0 %520
        %vm523 = vcmask 56368
        %524 = vst.msk [vmem:[%s227] sm:$0xff] %vm523, %v521
        %v525 = vsel %vm513, %v377, 0.0
        %v526 = vsel %vm394, %v525, 0.0
        %527 = vadd.xlane.f32.xlu0 %v526
        %v528 = vpop.xlane.xlu0 %527
        %v529 = vsub.f32 %v528, %v355
        %531 = vrot.lane.b32.xlu0 %v529, 6
        %v532 = vpop.permute.xlu0 %531
        %vm534 = vcmask 64568
        %535 = vst.msk [vmem:[%s227] sm:$0xff] %vm534, %v532
        %v536 = vsel %vm513, %v388, 0.0
        %v537 = vsel %vm394, %v536, 0.0
        %538 = vadd.xlane.f32.xlu0 %v537
        %v539 = vpop.xlane.xlu0 %538
        %v540 = vsub.f32 %v539, %v355
        %542 = vrot.lane.b32.xlu0 %v540, 6
        %v543 = vpop.permute.xlu0 %542
        %vm545 = vcmask 72768
        %546 = vst.msk [vmem:[%s227] sm:$0xff] %vm545, %v543
        %v547 = vsel %vm513, inf, %v492
        %v548 = vsel %vm394, %v547, inf
        %549 = vmin.xlane.f32.xlu0 %v548
        %v550 = vpop.xlane.xlu0 %549
        %vm551 = vcmp.eq.f32.partialorder %v547, %v550
        %v552 = vsel %vm551, %v393, 64
        %v553 = vsel %vm394, %v552, 2147483647
        %v554 = vand.u32 %v553, 65535
        %v555 = vshra.s32 %v553, 16
        %v556 = vcvt.s32.f32 %v554
        %v557 = vcvt.s32.f32 %v555
        %558 = vmin.xlane.f32.xlu0 %v557
        %v559 = vpop.xlane.xlu0 %558
        %vm560 = vcmp.eq.f32.partialorder %v557, %v559
        %v561 = vsel %vm560, %v556, inf
        %562 = vmin.xlane.f32.xlu0 %v561
        %v563 = vpop.xlane.xlu0 %562
        %v564 = vcvt.f32.s32 %v563
        %v565 = vcvt.f32.s32 %v559
        %v566 = vshll.u32 %v565, 16
        %v567 = vadd.s32 %v566, %v564
        %vm568 = vcmp.eq.s32.totalorder %v393, %v567
        %v569 = vsel %vm568, %v367, 0.0
        %v570 = vsel %vm394, %v569, 0.0
        %571 = vadd.xlane.f32.xlu0 %v570
        %v572 = vpop.xlane.xlu0 %571
        %v573 = vsub.f32 %v572, %v355
        %575 = vrot.lane.b32.xlu0 %v573, 9
        %v576 = vpop.permute.xlu0 %575
        %vm578 = vcmask 80968
        %579 = vst.msk [vmem:[%s227] sm:$0xff] %vm578, %v576
        %v580 = vsel %vm568, %v377, 0.0
        %v581 = vsel %vm394, %v580, 0.0
        %582 = vadd.xlane.f32.xlu0 %v581
        %v583 = vpop.xlane.xlu0 %582
        %v584 = vsub.f32 %v583, %v355
        %586 = vrot.lane.b32.xlu0 %v584, 9
        %v587 = vpop.permute.xlu0 %586
        %vm589 = vcmask 89168
        %590 = vst.msk [vmem:[%s227] sm:$0xff] %vm589, %v587
        %v591 = vsel %vm568, %v388, 0.0
        %v592 = vsel %vm394, %v591, 0.0
        %593 = vadd.xlane.f32.xlu0 %v592
        %v594 = vpop.xlane.xlu0 %593
        %v595 = vsub.f32 %v594, %v355
        %597 = vrot.lane.b32.xlu0 %v595, 9
        %v598 = vpop.permute.xlu0 %597
        %vm600 = vcmask 97368
        %601 = vst.msk [vmem:[%s227] sm:$0xff] %vm600, %v598
        %v602 = vsel %vm568, inf, %v547
        %v603 = vsel %vm394, %v602, inf
        %604 = vmin.xlane.f32.xlu0 %v603
        %v605 = vpop.xlane.xlu0 %604
        %vm606 = vcmp.eq.f32.partialorder %v602, %v605
        %v607 = vsel %vm606, %v393, 64
        %v608 = vsel %vm394, %v607, 2147483647
        %v609 = vand.u32 %v608, 65535
        %v610 = vshra.s32 %v608, 16
        %v611 = vcvt.s32.f32 %v609
        %v612 = vcvt.s32.f32 %v610
        %613 = vmin.xlane.f32.xlu0 %v612
        %v614 = vpop.xlane.xlu0 %613
        %vm615 = vcmp.eq.f32.partialorder %v612, %v614
        %v616 = vsel %vm615, %v611, inf
        %617 = vmin.xlane.f32.xlu0 %v616
        %v618 = vpop.xlane.xlu0 %617
        %v619 = vcvt.f32.s32 %v618
        %v620 = vcvt.f32.s32 %v614
        %v621 = vshll.u32 %v620, 16
        %v622 = vadd.s32 %v621, %v619
        %vm623 = vcmp.eq.s32.totalorder %v393, %v622
        %v624 = vsel %vm623, %v367, 0.0
        %v625 = vsel %vm394, %v624, 0.0
        %626 = vadd.xlane.f32.xlu0 %v625
        %v627 = vpop.xlane.xlu0 %626
        %v628 = vsub.f32 %v627, %v355
        %630 = vrot.lane.b32.xlu0 %v628, 12
        %v631 = vpop.permute.xlu0 %630
        %vm633 = vcmask 105568
        %634 = vst.msk [vmem:[%s227] sm:$0xff] %vm633, %v631
        %v635 = vsel %vm623, %v377, 0.0
        %v636 = vsel %vm394, %v635, 0.0
        %637 = vadd.xlane.f32.xlu0 %v636
        %v638 = vpop.xlane.xlu0 %637
        %v639 = vsub.f32 %v638, %v355
        %641 = vrot.lane.b32.xlu0 %v639, 12
        %v642 = vpop.permute.xlu0 %641
        %vm644 = vcmask 113768
        %645 = vst.msk [vmem:[%s227] sm:$0xff] %vm644, %v642
        %v646 = vsel %vm623, %v388, 0.0
        %v647 = vsel %vm394, %v646, 0.0
        %648 = vadd.xlane.f32.xlu0 %v647
        %v649 = vpop.xlane.xlu0 %648
        %v650 = vsub.f32 %v649, %v355
        %652 = vrot.lane.b32.xlu0 %v650, 12
        %v653 = vpop.permute.xlu0 %652
        %vm655 = vcmask 121968
        %656 = vst.msk [vmem:[%s227] sm:$0xff] %vm655, %v653
        %v657 = vsel %vm623, inf, %v602
        %v658 = vsel %vm394, %v657, inf
        %659 = vmin.xlane.f32.xlu0 %v658
        %v660 = vpop.xlane.xlu0 %659
        %vm661 = vcmp.eq.f32.partialorder %v657, %v660
        %v662 = vsel %vm661, %v393, 64
        %v663 = vsel %vm394, %v662, 2147483647
        %v664 = vand.u32 %v663, 65535
        %v665 = vshra.s32 %v663, 16
        %v666 = vcvt.s32.f32 %v664
        %v667 = vcvt.s32.f32 %v665
        %668 = vmin.xlane.f32.xlu0 %v667
        %v669 = vpop.xlane.xlu0 %668
        %vm670 = vcmp.eq.f32.partialorder %v667, %v669
        %v671 = vsel %vm670, %v666, inf
        %672 = vmin.xlane.f32.xlu0 %v671
        %v673 = vpop.xlane.xlu0 %672
        %v674 = vcvt.f32.s32 %v673
        %v675 = vcvt.f32.s32 %v669
        %v676 = vshll.u32 %v675, 16
        %v677 = vadd.s32 %v676, %v674
        %vm678 = vcmp.eq.s32.totalorder %v393, %v677
        %v679 = vsel %vm678, %v367, 0.0
        %v680 = vsel %vm394, %v679, 0.0
        %681 = vadd.xlane.f32.xlu0 %v680
        %v682 = vpop.xlane.xlu0 %681
        %v683 = vsub.f32 %v682, %v355
        %685 = vrot.lane.b32.xlu0 %v683, 15
        %v686 = vpop.permute.xlu0 %685
        %vm688 = vcmask 130168
        %689 = vst.msk [vmem:[%s227] sm:$0xff] %vm688, %v686
        %v690 = vsel %vm678, %v377, 0.0
        %v691 = vsel %vm394, %v690, 0.0
        %692 = vadd.xlane.f32.xlu0 %v691
        %v693 = vpop.xlane.xlu0 %692
        %v694 = vsub.f32 %v693, %v355
        %696 = vrot.lane.b32.xlu0 %v694, 15
        %v697 = vpop.permute.xlu0 %696
        %vm699 = vcmask 138368
        %700 = vst.msk [vmem:[%s227] sm:$0xff] %vm699, %v697
        %v701 = vsel %vm678, %v388, 0.0
        %v702 = vsel %vm394, %v701, 0.0
        %703 = vadd.xlane.f32.xlu0 %v702
        %v704 = vpop.xlane.xlu0 %703
        %v705 = vsub.f32 %v704, %v355
        %707 = vrot.lane.b32.xlu0 %v705, 15
        %v708 = vpop.permute.xlu0 %707
        %vm710 = vcmask 146568
        %711 = vst.msk [vmem:[%s227] sm:$0xff] %vm710, %v708
        %v712 = vsel %vm678, inf, %v657
        %v713 = vsel %vm394, %v712, inf
        %714 = vmin.xlane.f32.xlu0 %v713
        %v715 = vpop.xlane.xlu0 %714
        %vm716 = vcmp.eq.f32.partialorder %v712, %v715
        %v717 = vsel %vm716, %v393, 64
        %v718 = vsel %vm394, %v717, 2147483647
        %v719 = vand.u32 %v718, 65535
        %v720 = vshra.s32 %v718, 16
        %v721 = vcvt.s32.f32 %v719
        %v722 = vcvt.s32.f32 %v720
        %723 = vmin.xlane.f32.xlu0 %v722
        %v724 = vpop.xlane.xlu0 %723
        %vm725 = vcmp.eq.f32.partialorder %v722, %v724
        %v726 = vsel %vm725, %v721, inf
        %727 = vmin.xlane.f32.xlu0 %v726
        %v728 = vpop.xlane.xlu0 %727
        %v729 = vcvt.f32.s32 %v728
        %v730 = vcvt.f32.s32 %v724
        %v731 = vshll.u32 %v730, 16
        %v732 = vadd.s32 %v731, %v729
        %vm733 = vcmp.eq.s32.totalorder %v393, %v732
        %v734 = vsel %vm733, %v367, 0.0
        %v735 = vsel %vm394, %v734, 0.0
        %736 = vadd.xlane.f32.xlu0 %v735
        %v737 = vpop.xlane.xlu0 %736
        %v738 = vsub.f32 %v737, %v355
        %740 = vrot.lane.b32.xlu0 %v738, 18
        %v741 = vpop.permute.xlu0 %740
        %vm743 = vcmask 154768
        %744 = vst.msk [vmem:[%s227] sm:$0xff] %vm743, %v741
        %v745 = vsel %vm733, %v377, 0.0
        %v746 = vsel %vm394, %v745, 0.0
        %747 = vadd.xlane.f32.xlu0 %v746
        %v748 = vpop.xlane.xlu0 %747
        %v749 = vsub.f32 %v748, %v355
        %751 = vrot.lane.b32.xlu0 %v749, 18
        %v752 = vpop.permute.xlu0 %751
        %vm754 = vcmask 162968
        %755 = vst.msk [vmem:[%s227] sm:$0xff] %vm754, %v752
        %v756 = vsel %vm733, %v388, 0.0
        %v757 = vsel %vm394, %v756, 0.0
        %758 = vadd.xlane.f32.xlu0 %v757
        %v759 = vpop.xlane.xlu0 %758
        %v760 = vsub.f32 %v759, %v355
        %762 = vrot.lane.b32.xlu0 %v760, 18
        %v763 = vpop.permute.xlu0 %762
        %vm765 = vcmask 171168
        %766 = vst.msk [vmem:[%s227] sm:$0xff] %vm765, %v763
        %v767 = vsel %vm733, inf, %v712
        %v768 = vsel %vm394, %v767, inf
        %769 = vmin.xlane.f32.xlu0 %v768
        %v770 = vpop.xlane.xlu0 %769
        %vm771 = vcmp.eq.f32.partialorder %v767, %v770
        %v772 = vsel %vm771, %v393, 64
        %v773 = vsel %vm394, %v772, 2147483647
        %v774 = vand.u32 %v773, 65535
        %v775 = vshra.s32 %v773, 16
        %v776 = vcvt.s32.f32 %v774
        %v777 = vcvt.s32.f32 %v775
        %778 = vmin.xlane.f32.xlu0 %v777
        %v779 = vpop.xlane.xlu0 %778
        %vm780 = vcmp.eq.f32.partialorder %v777, %v779
        %v781 = vsel %vm780, %v776, inf
        %782 = vmin.xlane.f32.xlu0 %v781
        %v783 = vpop.xlane.xlu0 %782
        %v784 = vcvt.f32.s32 %v783
        %v785 = vcvt.f32.s32 %v779
        %v786 = vshll.u32 %v785, 16
        %v787 = vadd.s32 %v786, %v784
        %vm788 = vcmp.eq.s32.totalorder %v393, %v787
        %v789 = vsel %vm788, %v367, 0.0
        %v790 = vsel %vm394, %v789, 0.0
        %791 = vadd.xlane.f32.xlu0 %v790
        %v792 = vpop.xlane.xlu0 %791
        %v793 = vsub.f32 %v792, %v355
        %795 = vrot.lane.b32.xlu0 %v793, 21
        %v796 = vpop.permute.xlu0 %795
        %vm798 = vcmask 179368
        %799 = vst.msk [vmem:[%s227] sm:$0xff] %vm798, %v796
        %v800 = vsel %vm788, %v377, 0.0
        %v801 = vsel %vm394, %v800, 0.0
        %802 = vadd.xlane.f32.xlu0 %v801
        %v803 = vpop.xlane.xlu0 %802
        %v804 = vsub.f32 %v803, %v355
        %806 = vrot.lane.b32.xlu0 %v804, 21
        %v807 = vpop.permute.xlu0 %806
        %vm809 = vcmask 187568
        %810 = vst.msk [vmem:[%s227] sm:$0xff] %vm809, %v807
        %v811 = vsel %vm788, %v388, 0.0
        %v812 = vsel %vm394, %v811, 0.0
        %813 = vadd.xlane.f32.xlu0 %v812
        %v814 = vpop.xlane.xlu0 %813
        %v815 = vsub.f32 %v814, %v355
        %817 = vrot.lane.b32.xlu0 %v815, 21
        %v818 = vpop.permute.xlu0 %817
        %vm820 = vcmask 195768
        %821 = vst.msk [vmem:[%s227] sm:$0xff] %vm820, %v818
        %p822 = scmp.lt.s32.totalorder %s25, 1
        %s823 = scalar_select %p822, %s25, 1
        %p824 = scmp.lt.s32.totalorder %s26, 0
        %s825 = scalar_select %p824, %s26, 0
        %s826 = sadd.s32 %s825, %s823
        %s827 = smul.addr %s826, 8
        %s828 = scalar_lea.vmem %s2, %s827
        %s829 = sand.u32 %s123, 1
        %s830 = scalar_lea.sflag [#allocation5], %s829
        %s831 = sand.u32 %s123, 1
        %s832 = smul.addr %s831, 8
        %s833 = scalar_lea.vmem [#allocation6], %s832
        // Predicated region
        $region44: #{tpu_custom_call.1} parent=27 // pred_check
          %p834 = pneg %p105
        $region45: #{tpu_custom_call.1} parent=27 // pred_check_branch
          %836 = sbr.rel (%p834) target = $region47
        $region46: #{tpu_custom_call.1} parent=27 // pred_region
          _
        $region47: #{tpu_custom_call.1} parent=27 // pred_fallthru
          _
        // Predicated region
        $region48: #{tpu_custom_call.1} parent=27 // pred_check
          %p837 = pneg %p133
        $region49: #{tpu_custom_call.1} parent=27 // pred_check_branch
          %839 = sbr.rel (%p837) target = $region51
        $region50: #{tpu_custom_call.1} parent=27 // pred_region
          %s841 = ssub.s32 128, 128
          %842 = vsyncadd %s830, %s841
          %s843 = sadd.s32 %s26, %s25
          %s844 = smul.addr %s843, 128
          %s845 = scalar_lea.hbm %s3, %s844
          %s847 = sshll.u32 %s833, 4
          %s848 = int_to_ptr.vmem [resolvable:$true] %s847
          %850 = dma.vmem_to_hbm [thread:$0]  %s848, 128, %s845, %s830
        $region51: #{tpu_custom_call.1} parent=27 // pred_fallthru
          _
      $region28: #{tpu_custom_call.1} parent=5 // pred_fallthru
        _
      %p851 = scmp.le.s32.totalorder 2, %s16
      // Predicated region
      $region52: #{tpu_custom_call.1} parent=5 // pred_check
        %p852 = pneg %p851
      $region53: #{tpu_custom_call.1} parent=5 // pred_check_branch
        %854 = sbr.rel (%p852) target = $region55
      $region54: #{tpu_custom_call.1} parent=5 // pred_region
        %s855 = ssub.s32 %s16, 2
        // Predicated region
        $region56: #{tpu_custom_call.1} parent=54 // pred_check
          %p856 = pneg %p111
        $region57: #{tpu_custom_call.1} parent=54 // pred_check_branch
          %858 = sbr.rel (%p856) target = $region59
        $region58: #{tpu_custom_call.1} parent=54 // pred_region
          %p859 = scmp.lt.s32.totalorder %s27, 1
          %s860 = scalar_select %p859, %s27, 1
          %p861 = scmp.lt.s32.totalorder %s28, 0
          %s862 = scalar_select %p861, %s28, 0
          %s863 = sadd.s32 %s862, %s860
          %s864 = smul.addr %s863, 8
          %s865 = scalar_lea.vmem %s2, %s864
        $region59: #{tpu_custom_call.1} parent=54 // pred_fallthru
          _
        // Predicated region
        $region60: #{tpu_custom_call.1} parent=54 // pred_check
          %p866 = pneg %p139
        $region61: #{tpu_custom_call.1} parent=54 // pred_check_branch
          %868 = sbr.rel (%p866) target = $region63
        $region62: #{tpu_custom_call.1} parent=54 // pred_region
          %s869 = sand.u32 %s124, 1
          %s870 = scalar_lea.sflag [#allocation5], %s869
          %s871 = sand.u32 %s124, 1
          %s872 = smul.addr %s871, 8
          %s873 = scalar_lea.vmem [#allocation6], %s872
          %874 = dma.done %s870, 128
        $region63: #{tpu_custom_call.1} parent=54 // pred_fallthru
          _
      $region55: #{tpu_custom_call.1} parent=5 // pred_fallthru
        _
    $region6: #{tpu_custom_call.1} parent=1 // loop_footer
      %s20 = sadd.s32 1, %s16
    $region7: #{tpu_custom_call.1} parent=1 // loop_footer_branch
      %15 = sbr.rel target = $region3
    $region8: #{tpu_custom_call.1} parent=1 // loop_exit
      _
    %875 = vsyncpa [#allocation4], 1
    %s876 = scalar_lea.sflag [#allocation4], 1
    %877 = vsyncpa %s876, 1
    %878 = vsyncpa [#allocation5], 1
    %s879 = scalar_lea.sflag [#allocation5], 1
    %880 = vsyncpa %s879, 1

</llo_original>
